<compile_context>
chip_gen: v6e
topology: v6e:2x2x1
jax: 0.10.0
libtpu: 0.0.40
codegen_flags: <defaults>
</compile_context>

<pallas_src>
import functools

import jax
import jax.numpy as jnp
from jax.experimental import pallas as pl
from jax.experimental.pallas import tpu as pltpu


def _round_up(n, m):
    return ((n + m - 1) // m) * m


def _leaky_relu(x, slope=0.2):
    return jnp.where(x > 0, x, slope * x)


def discriminator_kernel(x_ref, w1_ref, b1_ref, w2_ref, b2_ref, w3_ref, b3_ref,
                         o_ref, *, compute_dtype):
    """Whole MLP for one batch tile. All weights resident in VMEM."""
    # Cast x (f32 straight from HBM) to the MXU compute dtype on the VPU.
    # This is hidden under the MXU and avoids a separate XLA cast pass over x.
    x = x_ref[...].astype(compute_dtype)

    # fc1 + LeakyReLU(0.2): bf16 MXU operands, f32 accumulation, f32 epilogue.
    h1 = jnp.dot(x, w1_ref[...], preferred_element_type=jnp.float32)
    h1 = _leaky_relu(h1 + b1_ref[...])

    # fc2 + LeakyReLU(0.2): cast activations to bf16 only for the MXU operand.
    h2 = jnp.dot(h1.astype(compute_dtype), w2_ref[...],
                 preferred_element_type=jnp.float32)
    h2 = _leaky_relu(h2 + b2_ref[...])

    # fc3 (H2 -> 1): VPU multiply + lane reduction (avoids a 1-column matmul).
    # b3 is a scalar read from SMEM.
    logits = jnp.sum(h2 * w3_ref[...], axis=-1, keepdims=True) + b3_ref[0]

    # Sigmoid (exp runs on the EUP).
    o_ref[...] = (1.0 / (1.0 + jnp.exp(-logits))).astype(o_ref.dtype)


@functools.partial(jax.jit, static_argnames=("block_b", "compute_dtype"))
def discriminator_forward(x_nchw, params, *, block_b=512,
                          compute_dtype=jnp.bfloat16):
    """x_nchw: [B, C, H, W] float32. Returns sigmoid scores [B, 1] float32."""
    B = x_nchw.shape[0]
    # Flatten only (same as torch .view); NO dtype cast here - the kernel
    # casts on the VPU so x is read from HBM exactly once, in f32.
    x = x_nchw.reshape(B, -1)
    F = x.shape[1]

    # Weights in compute dtype (bf16); biases / fc3 row stay f32.
    w1 = params["w1"].astype(compute_dtype)
    w2 = params["w2"].astype(compute_dtype)
    b1 = params["b1"].reshape(1, -1).astype(jnp.float32)
    b2 = params["b2"].reshape(1, -1).astype(jnp.float32)
    w3_row = params["w3"].reshape(1, -1).astype(jnp.float32)   # (1, H2)
    b3 = params["b3"].reshape(-1).astype(jnp.float32)          # (1,) -> SMEM

    H1 = w1.shape[1]
    H2 = w2.shape[1]

    # ---- Batch tile under an explicit VMEM budget ---------------------------
    # Resident (single-buffered) weight bytes + double-buffered f32 x tiles
    # must stay well under v7x's 64 MiB physical VMEM.
    x_bytes_per_row = F * x.dtype.itemsize
    resident_bytes = (w1.size * w1.dtype.itemsize
                      + w2.size * w2.dtype.itemsize
                      + (b1.size + b2.size + w3_row.size) * 4)
    budget = 40 * 1024 * 1024
    max_tb_vmem = max(8, ((budget - resident_bytes) // (2 * x_bytes_per_row))
                      // 8 * 8)
    tb = int(min(block_b, _round_up(B, 8), max_tb_vmem))
    grid = (pl.cdiv(B, tb),)

    vmem_need = 2 * tb * x_bytes_per_row + resident_bytes + 2 * tb * 4
    vmem_limit_bytes = int(min(max(vmem_need + 16 * 1024 * 1024,
                                   32 * 1024 * 1024),
                               64 * 1024 * 1024))

    out = pl.pallas_call(
        functools.partial(discriminator_kernel, compute_dtype=compute_dtype),
        out_shape=jax.ShapeDtypeStruct((B, 1), jnp.float32),
        grid_spec=pltpu.PrefetchScalarGridSpec(
            num_scalar_prefetch=0,
            grid=grid,
            in_specs=[
                # x tile: pipelined / double-buffered over the batch grid.
                pl.BlockSpec((tb, F), lambda i: (i, 0)),
                # Grid-invariant operands: whole array resident in VMEM
                # (single buffer, DMA'd once for the whole kernel).
                pl.BlockSpec(memory_space=pltpu.MemorySpace.VMEM),  # w1
                pl.BlockSpec(memory_space=pltpu.MemorySpace.VMEM),  # b1
                pl.BlockSpec(memory_space=pltpu.MemorySpace.VMEM),  # w2
                pl.BlockSpec(memory_space=pltpu.MemorySpace.VMEM),  # b2
                pl.BlockSpec(memory_space=pltpu.MemorySpace.VMEM),  # w3 row
                pl.BlockSpec(memory_space=pltpu.MemorySpace.SMEM),  # b3 scalar
            ],
            out_specs=pl.BlockSpec((tb, 1), lambda i: (i, 0)),
        ),
        compiler_params=pltpu.CompilerParams(
            # Batch tiles are independent -> always parallel (lets v7x shard
            # the grid across both TensorCores when grid[0] > 1).
            dimension_semantics=("parallel",),
            vmem_limit_bytes=vmem_limit_bytes,
        ),
    )(x, w1, b1, w2, b2, w3_row, b3)
    return out


def init_params(key, in_features, h1=512, h2=256):
    """PyTorch-Linear-style uniform(-1/sqrt(in), 1/sqrt(in)) init.
    Weights stored as [in, out] (= torch weight.T); biases as [1, out]."""
    ks = jax.random.split(key, 6)

    def lin(kw, kb, fan_in, fan_out):
        bound = 1.0 / jnp.sqrt(fan_in)
        w = jax.random.uniform(kw, (fan_in, fan_out), jnp.float32, -bound, bound)
        b = jax.random.uniform(kb, (1, fan_out), jnp.float32, -bound, bound)
        return w, b

    w1, b1 = lin(ks[0], ks[1], in_features, h1)
    w2, b2 = lin(ks[2], ks[3], h1, h2)
    w3, b3 = lin(ks[4], ks[5], h2, 1)
    return {"w1": w1, "b1": b1, "w2": w2, "b2": b2, "w3": w3, "b3": b3}


def reference_forward_f32(x_nchw, params):
    """Pure f32 reference (matches the PyTorch module semantics)."""
    x = x_nchw.reshape(x_nchw.shape[0], -1)
    h1 = _leaky_relu(x @ params["w1"] + params["b1"])
    h2 = _leaky_relu(h1 @ params["w2"] + params["b2"])
    return jax.nn.sigmoid(h2 @ params["w3"] + params["b3"])


def reference_forward_mixed(x_nchw, params, compute_dtype=jnp.bfloat16):
    """Reference that mimics the kernel's dtype path (bf16 MXU, f32 accumulate)."""
    x = x_nchw.reshape(x_nchw.shape[0], -1).astype(compute_dtype)
    w1 = params["w1"].astype(compute_dtype)
    w2 = params["w2"].astype(compute_dtype)
    h1 = jnp.dot(x, w1, preferred_element_type=jnp.float32) + params["b1"]
    h1 = _leaky_relu(h1).astype(compute_dtype)
    h2 = jnp.dot(h1, w2, preferred_element_type=jnp.float32) + params["b2"]
    h2 = _leaky_relu(h2)
    logits = jnp.sum(h2 * params["w3"].reshape(1, -1), axis=-1,
                     keepdims=True) + params["b3"].reshape(-1)
    return 1.0 / (1.0 + jnp.exp(-logits))


if __name__ == "__main__":
    key = jax.random.PRNGKey(0)
    k_x, k_p, k_x2 = jax.random.split(key, 3)

    # Small shapes consistent with the module: B=8, channels=4, img_size=16.
    B, C, H, W = 8, 4, 16, 16
    x = jax.random.normal(k_x, (B, C, H, W), jnp.float32)
    params = init_params(k_p, in_features=C * H * W)

    score = jax.block_until_ready(discriminator_forward(x, params))
    assert score.shape == (B, 1)
    assert jnp.allclose(score, reference_forward_mixed(x, params),
                        atol=1e-4, rtol=1e-4), "mismatch vs mixed-precision ref"
    assert jnp.allclose(score, reference_forward_f32(x, params),
                        atol=5e-3, rtol=5e-3), "mismatch vs f32 ref"

    # Second call with a batch that is not tile-aligned exercises the
    # multi-tile grid + partial trailing block path (no padding, no slicing).
    B2 = 200
    x2 = jax.random.normal(k_x2, (B2, C, H, W), jnp.float32)
    score2 = jax.block_until_ready(
        discriminator_forward(x2, params, block_b=64))
    assert score2.shape == (B2, 1)
    assert jnp.allclose(score2, reference_forward_mixed(x2, params),
                        atol=1e-4, rtol=1e-4), "mismatch on unaligned batch"

    print("KERNEL_OK")
</pallas_src>

<mosaic_0001>
module attributes {stable_mosaic.version = 11 : i64} {
  func.func @discriminator_kernel(%arg0: i32, %arg1: memref<8x1024xf32, #tpu.memory_space<vmem>>, %arg2: memref<1024x512xbf16, #tpu.memory_space<vmem>>, %arg3: memref<1x512xf32, #tpu.memory_space<vmem>>, %arg4: memref<512x256xbf16, #tpu.memory_space<vmem>>, %arg5: memref<1x256xf32, #tpu.memory_space<vmem>>, %arg6: memref<1x256xf32, #tpu.memory_space<vmem>>, %arg7: memref<1xf32, #tpu.memory_space<smem>>, %arg8: memref<8x1xf32, #tpu.memory_space<vmem>>) attributes {dimension_semantics = [#tpu.dimension_semantics<parallel>], iteration_bounds = array<i64: 1>, scalar_prefetch = 0 : i64, scratch_operands = 0 : i64, tpu.core_type = #tpu.core_type<tc>, window_params = [{transform_indices = @transform_0, window_bounds = array<i64: 8, 1024>}, {pipeline_mode = #tpu.pipeline_mode<synchronous>, transform_indices = @transform_1, window_bounds = array<i64: 1024, 512>}, {pipeline_mode = #tpu.pipeline_mode<synchronous>, transform_indices = @transform_2, window_bounds = array<i64: 1, 512>}, {pipeline_mode = #tpu.pipeline_mode<synchronous>, transform_indices = @transform_3, window_bounds = array<i64: 512, 256>}, {pipeline_mode = #tpu.pipeline_mode<synchronous>, transform_indices = @transform_4, window_bounds = array<i64: 1, 256>}, {pipeline_mode = #tpu.pipeline_mode<synchronous>, transform_indices = @transform_5, window_bounds = array<i64: 1, 256>}, {transform_indices = @transform_6, window_bounds = array<i64: 1>}, {transform_indices = @transform_7, window_bounds = array<i64: 8, 1>}]} {
    %c0 = arith.constant 0 : index
    %c0_0 = arith.constant 0 : index
    %0 = vector.load %arg1[%c0, %c0_0] : memref<8x1024xf32, #tpu.memory_space<vmem>>, vector<8x1024xf32>
    %1 = arith.truncf %0 : vector<8x1024xf32> to vector<8x1024xbf16>
    %c0_1 = arith.constant 0 : index
    %c0_2 = arith.constant 0 : index
    %2 = vector.load %arg2[%c0_1, %c0_2] : memref<1024x512xbf16, #tpu.memory_space<vmem>>, vector<1024x512xbf16>
    %cst = arith.constant dense<0.000000e+00> : vector<8x512xf32>
    %3 = tpu.matmul %1, %2, %cst {dimension_numbers = #tpu.dot_dimension_numbers<[1], [0], [0], [1], [0, 0, 1, 1], [], []>} : vector<8x1024xbf16>, vector<1024x512xbf16>, vector<8x512xf32> -> vector<8x512xf32>
    %c0_3 = arith.constant 0 : index
    %c0_4 = arith.constant 0 : index
    %4 = vector.load %arg3[%c0_3, %c0_4] : memref<1x512xf32, #tpu.memory_space<vmem>>, vector<1x512xf32>
    %5 = vector.broadcast %4 : vector<1x512xf32> to vector<8x512xf32>
    %6 = arith.addf %3, %5 : vector<8x512xf32>
    %cst_5 = arith.constant 0.000000e+00 : f32
    %7 = vector.broadcast %cst_5 : f32 to vector<8x512xf32>
    %8 = arith.cmpf ogt, %6, %7 : vector<8x512xf32>
    %cst_6 = arith.constant 2.000000e-01 : f32
    %9 = vector.broadcast %cst_6 : f32 to vector<8x512xf32>
    %10 = arith.mulf %9, %6 : vector<8x512xf32>
    %11 = arith.select %8, %6, %10 : vector<8x512xi1>, vector<8x512xf32>
    %12 = arith.truncf %11 : vector<8x512xf32> to vector<8x512xbf16>
    %c0_7 = arith.constant 0 : index
    %c0_8 = arith.constant 0 : index
    %13 = vector.load %arg4[%c0_7, %c0_8] : memref<512x256xbf16, #tpu.memory_space<vmem>>, vector<512x256xbf16>
    %cst_9 = arith.constant dense<0.000000e+00> : vector<8x256xf32>
    %14 = tpu.matmul %12, %13, %cst_9 {dimension_numbers = #tpu.dot_dimension_numbers<[1], [0], [0], [1], [0, 0, 1, 1], [], []>} : vector<8x512xbf16>, vector<512x256xbf16>, vector<8x256xf32> -> vector<8x256xf32>
    %c0_10 = arith.constant 0 : index
    %c0_11 = arith.constant 0 : index
    %15 = vector.load %arg5[%c0_10, %c0_11] : memref<1x256xf32, #tpu.memory_space<vmem>>, vector<1x256xf32>
    %16 = vector.broadcast %15 : vector<1x256xf32> to vector<8x256xf32>
    %17 = arith.addf %14, %16 : vector<8x256xf32>
    %cst_12 = arith.constant 0.000000e+00 : f32
    %18 = vector.broadcast %cst_12 : f32 to vector<8x256xf32>
    %19 = arith.cmpf ogt, %17, %18 : vector<8x256xf32>
    %cst_13 = arith.constant 2.000000e-01 : f32
    %20 = vector.broadcast %cst_13 : f32 to vector<8x256xf32>
    %21 = arith.mulf %20, %17 : vector<8x256xf32>
    %22 = arith.select %19, %17, %21 : vector<8x256xi1>, vector<8x256xf32>
    %c0_14 = arith.constant 0 : index
    %c0_15 = arith.constant 0 : index
    %23 = vector.load %arg6[%c0_14, %c0_15] : memref<1x256xf32, #tpu.memory_space<vmem>>, vector<1x256xf32>
    %24 = vector.broadcast %23 : vector<1x256xf32> to vector<8x256xf32>
    %25 = arith.mulf %22, %24 : vector<8x256xf32>
    %cst_16 = arith.constant dense<0.000000e+00> : vector<8xf32>
    %26 = vector.multi_reduction <add>, %25, %cst_16 [1] : vector<8x256xf32> to vector<8xf32>
    %27 = vector.shape_cast %26 : vector<8xf32> to vector<8x1xf32>
    %c0_17 = arith.constant 0 : index
    %28 = memref.load %arg7[%c0_17] : memref<1xf32, #tpu.memory_space<smem>>
    %29 = vector.broadcast %28 : f32 to vector<8x1xf32>
    %30 = arith.addf %27, %29 : vector<8x1xf32>
    %cst_18 = arith.constant 0.000000e+00 : f32
    %31 = vector.broadcast %cst_18 : f32 to vector<8x1xf32>
    %32 = arith.subf %31, %30 : vector<8x1xf32>
    %33 = math.exp %32 : vector<8x1xf32>
    %cst_19 = arith.constant 1.000000e+00 : f32
    %34 = vector.broadcast %cst_19 : f32 to vector<8x1xf32>
    %35 = arith.addf %34, %33 : vector<8x1xf32>
    %cst_20 = arith.constant 1.000000e+00 : f32
    %36 = vector.broadcast %cst_20 : f32 to vector<8x1xf32>
    %37 = arith.divf %36, %35 : vector<8x1xf32>
    %c0_21 = arith.constant 0 : index
    %c0_22 = arith.constant 0 : index
    %38 = vector.load %arg8[%c0_21, %c0_22] : memref<8x1xf32, #tpu.memory_space<vmem>>, vector<8x1xf32>
    tpu.vector_store %arg8[%c0_21, %c0_22], %37 {strides = array<i32>} : memref<8x1xf32, #tpu.memory_space<vmem>>, vector<8x1xf32>,
    return
  }
  func.func @transform_0(%arg0: i32) -> (i32, i32) {
    %c0_i32 = arith.constant 0 : i32
    %c0_i32_0 = arith.constant 0 : i32
    return %arg0, %c0_i32 : i32, i32
  }
  func.func @transform_1(%arg0: i32) -> (i32, i32) {
    %c0_i32 = arith.constant 0 : i32
    %c0_i32_0 = arith.constant 0 : i32
    %c0_i32_1 = arith.constant 0 : i32
    return %c0_i32, %c0_i32_0 : i32, i32
  }
  func.func @transform_2(%arg0: i32) -> (i32, i32) {
    %c0_i32 = arith.constant 0 : i32
    %c0_i32_0 = arith.constant 0 : i32
    %c0_i32_1 = arith.constant 0 : i32
    return %c0_i32, %c0_i32_0 : i32, i32
  }
  func.func @transform_3(%arg0: i32) -> (i32, i32) {
    %c0_i32 = arith.constant 0 : i32
    %c0_i32_0 = arith.constant 0 : i32
    %c0_i32_1 = arith.constant 0 : i32
    return %c0_i32, %c0_i32_0 : i32, i32
  }
  func.func @transform_4(%arg0: i32) -> (i32, i32) {
    %c0_i32 = arith.constant 0 : i32
    %c0_i32_0 = arith.constant 0 : i32
    %c0_i32_1 = arith.constant 0 : i32
    return %c0_i32, %c0_i32_0 : i32, i32
  }
  func.func @transform_5(%arg0: i32) -> (i32, i32) {
    %c0_i32 = arith.constant 0 : i32
    %c0_i32_0 = arith.constant 0 : i32
    %c0_i32_1 = arith.constant 0 : i32
    return %c0_i32, %c0_i32_0 : i32, i32
  }
  func.func @transform_6(%arg0: i32) -> i32 {
    %c0_i32 = arith.constant 0 : i32
    %c0_i32_0 = arith.constant 0 : i32
    return %c0_i32 : i32
  }
  func.func @transform_7(%arg0: i32) -> (i32, i32) {
    %c0_i32 = arith.constant 0 : i32
    %c0_i32_0 = arith.constant 0 : i32
    return %arg0, %c0_i32 : i32, i32
  }
}

</mosaic_0001>

<llo_original>
// kernel: discriminator_forward.1
$region0: #{discriminator_forward.1}
  #allocation0 [shape = 'u32[]', space=smem, size = 0x4, offset = 0x4, fixed_abs, tag = 'smem constant byte address 0x4 - core index']
  #allocation1 [shape = 'u32[144,128]{1,0:T(1,128)}', space=vmem, size = 0x12000, scoped, tag = 'internal scratch']
  #allocation2 [shape = 'f32[1]{0:T(128)S(6)}', space=smem, size = 0x200, scoped, tag = 'scoped memory for discriminator_forward.1']
  %s0 = inlined_call_operand.vmem [shape: f32[8,1024], index: 0, kind: input, shape index: {}]
  %s1 = inlined_call_operand.vmem [shape: bf16[1024,512], index: 1, kind: input, shape index: {}]
  %s2 = inlined_call_operand.vmem [shape: f32[1,512], index: 2, kind: input, shape index: {}]
  %s3 = inlined_call_operand.vmem [shape: bf16[512,256], index: 3, kind: input, shape index: {}]
  %s4 = inlined_call_operand.vmem [shape: f32[1,256], index: 4, kind: input, shape index: {}]
  %s5 = inlined_call_operand.vmem [shape: f32[1,256], index: 5, kind: input, shape index: {}]
  %s6 = inlined_call_operand.<no memory space> [shape: f32[1], index: 6, kind: input, shape index: {}]
  %s7 = inlined_call_operand.vmem [shape: f32[8,1], index: 7, kind: output, shape index: {}]
  %s8 = sld [smem:[#allocation0]]
  $region38: #{discriminator_forward.1} parent=0
    _
  %s10 = ssub.s32 1, %s8
  %s11 = scalar_select 0, %s10, %s8
  %12 = sst [smem:[#allocation2]] %s6
  // Predicated region
  $region2: #{discriminator_forward.1} parent=0 // pred_check
    _
  $region3: #{discriminator_forward.1} parent=0 // pred_check_branch
    %14 = sbr.rel (0) target = $region5
  $region4: #{discriminator_forward.1} parent=0 // pred_region
    _
  $region5: #{discriminator_forward.1} parent=0 // pred_fallthru
    _
  // Predicated region
  $region6: #{discriminator_forward.1} parent=0 // pred_check
    _
  $region7: #{discriminator_forward.1} parent=0 // pred_check_branch
    %16 = sbr.rel (0) target = $region9
  $region8: #{discriminator_forward.1} parent=0 // pred_region
    _
  $region9: #{discriminator_forward.1} parent=0 // pred_fallthru
    _
  // Predicated region
  $region10: #{discriminator_forward.1} parent=0 // pred_check
    _
  $region11: #{discriminator_forward.1} parent=0 // pred_check_branch
    %18 = sbr.rel (0) target = $region13
  $region12: #{discriminator_forward.1} parent=0 // pred_region
    _
  $region13: #{discriminator_forward.1} parent=0 // pred_fallthru
    _
  // Predicated region
  $region14: #{discriminator_forward.1} parent=0 // pred_check
    _
  $region15: #{discriminator_forward.1} parent=0 // pred_check_branch
    %20 = sbr.rel (0) target = $region17
  $region16: #{discriminator_forward.1} parent=0 // pred_region
    _
  $region17: #{discriminator_forward.1} parent=0 // pred_fallthru
    _
  // Predicated region
  $region18: #{discriminator_forward.1} parent=0 // pred_check
    _
  $region19: #{discriminator_forward.1} parent=0 // pred_check_branch
    %22 = sbr.rel (0) target = $region21
  $region20: #{discriminator_forward.1} parent=0 // pred_region
    _
  $region21: #{discriminator_forward.1} parent=0 // pred_fallthru
    _
  // Predicated region
  $region22: #{discriminator_forward.1} parent=0 // pred_check
    _
  $region23: #{discriminator_forward.1} parent=0 // pred_check_branch
    %24 = sbr.rel (0) target = $region25
  $region24: #{discriminator_forward.1} parent=0 // pred_region
    _
  $region25: #{discriminator_forward.1} parent=0 // pred_fallthru
    _
  // Predicated region
  $region26: #{discriminator_forward.1} parent=0 // pred_check
    _
  $region27: #{discriminator_forward.1} parent=0 // pred_check_branch
    %26 = sbr.rel (0) target = $region29
  $region28: #{discriminator_forward.1} parent=0 // pred_region
    _
  $region29: #{discriminator_forward.1} parent=0 // pred_fallthru
    _
  %v27 = vld [vmem:[%s0] sm:$0xff]
  %v28 = vld [vmem:[%s0 + $0x8] sm:$0xff]
  %v29 = vld [vmem:[%s0 + $0x10] sm:$0xff]
  %v30 = vld [vmem:[%s0 + $0x18] sm:$0xff]
  %v31 = vld [vmem:[%s0 + $0x20] sm:$0xff]
  %v32 = vld [vmem:[%s0 + $0x28] sm:$0xff]
  %v33 = vld [vmem:[%s0 + $0x30] sm:$0xff]
  %v34 = vld [vmem:[%s0 + $0x38] sm:$0xff]
  %v35 = vpack.c.bf16 %v27, %v27
  %v36 = vpack.c.bf16 %v28, %v28
  %v37 = vpack.c.bf16 %v29, %v29
  %v38 = vpack.c.bf16 %v30, %v30
  %v39 = vpack.c.bf16 %v31, %v31
  %v40 = vpack.c.bf16 %v32, %v32
  %v41 = vpack.c.bf16 %v33, %v33
  %v42 = vpack.c.bf16 %v34, %v34
  %v43 = vld [vmem:[%s1] sm:$0xff]
  %v44 = vld [vmem:[%s1 + $0x8] sm:$0xff]
  %v45 = vld [vmem:[%s1 + $0x10] sm:$0xff]
  %v46 = vld [vmem:[%s1 + $0x18] sm:$0xff]
  %v47 = vld [vmem:[%s1 + $0x20] sm:$0xff]
  %v48 = vld [vmem:[%s1 + $0x28] sm:$0xff]
  %v49 = vld [vmem:[%s1 + $0x30] sm:$0xff]
  %v50 = vld [vmem:[%s1 + $0x38] sm:$0xff]
  %v51 = vld [vmem:[%s1 + $0x40] sm:$0xff]
  %v52 = vld [vmem:[%s1 + $0x48] sm:$0xff]
  %v53 = vld [vmem:[%s1 + $0x50] sm:$0xff]
  %v54 = vld [vmem:[%s1 + $0x58] sm:$0xff]
  %v55 = vld [vmem:[%s1 + $0x60] sm:$0xff]
  %v56 = vld [vmem:[%s1 + $0x68] sm:$0xff]
  %v57 = vld [vmem:[%s1 + $0x70] sm:$0xff]
  %v58 = vld [vmem:[%s1 + $0x78] sm:$0xff]
  %v59 = vld [vmem:[%s1 + $0x80] sm:$0xff]
  %v60 = vld [vmem:[%s1 + $0x88] sm:$0xff]
  %v61 = vld [vmem:[%s1 + $0x90] sm:$0xff]
  %v62 = vld [vmem:[%s1 + $0x98] sm:$0xff]
  %v63 = vld [vmem:[%s1 + $0xa0] sm:$0xff]
  %v64 = vld [vmem:[%s1 + $0xa8] sm:$0xff]
  %v65 = vld [vmem:[%s1 + $0xb0] sm:$0xff]
  %v66 = vld [vmem:[%s1 + $0xb8] sm:$0xff]
  %v67 = vld [vmem:[%s1 + $0xc0] sm:$0xff]
  %v68 = vld [vmem:[%s1 + $0xc8] sm:$0xff]
  %v69 = vld [vmem:[%s1 + $0xd0] sm:$0xff]
  %v70 = vld [vmem:[%s1 + $0xd8] sm:$0xff]
  %v71 = vld [vmem:[%s1 + $0xe0] sm:$0xff]
  %v72 = vld [vmem:[%s1 + $0xe8] sm:$0xff]
  %v73 = vld [vmem:[%s1 + $0xf0] sm:$0xff]
  %v74 = vld [vmem:[%s1 + $0xf8] sm:$0xff]
  %v75 = vld [vmem:[%s1 + $0x100] sm:$0xff]
  %v76 = vld [vmem:[%s1 + $0x108] sm:$0xff]
  %v77 = vld [vmem:[%s1 + $0x110] sm:$0xff]
  %v78 = vld [vmem:[%s1 + $0x118] sm:$0xff]
  %v79 = vld [vmem:[%s1 + $0x120] sm:$0xff]
  %v80 = vld [vmem:[%s1 + $0x128] sm:$0xff]
  %v81 = vld [vmem:[%s1 + $0x130] sm:$0xff]
  %v82 = vld [vmem:[%s1 + $0x138] sm:$0xff]
  %v83 = vld [vmem:[%s1 + $0x140] sm:$0xff]
  %v84 = vld [vmem:[%s1 + $0x148] sm:$0xff]
  %v85 = vld [vmem:[%s1 + $0x150] sm:$0xff]
  %v86 = vld [vmem:[%s1 + $0x158] sm:$0xff]
  %v87 = vld [vmem:[%s1 + $0x160] sm:$0xff]
  %v88 = vld [vmem:[%s1 + $0x168] sm:$0xff]
  %v89 = vld [vmem:[%s1 + $0x170] sm:$0xff]
  %v90 = vld [vmem:[%s1 + $0x178] sm:$0xff]
  %v91 = vld [vmem:[%s1 + $0x180] sm:$0xff]
  %v92 = vld [vmem:[%s1 + $0x188] sm:$0xff]
  %v93 = vld [vmem:[%s1 + $0x190] sm:$0xff]
  %v94 = vld [vmem:[%s1 + $0x198] sm:$0xff]
  %v95 = vld [vmem:[%s1 + $0x1a0] sm:$0xff]
  %v96 = vld [vmem:[%s1 + $0x1a8] sm:$0xff]
  %v97 = vld [vmem:[%s1 + $0x1b0] sm:$0xff]
  %v98 = vld [vmem:[%s1 + $0x1b8] sm:$0xff]
  %v99 = vld [vmem:[%s1 + $0x1c0] sm:$0xff]
  %v100 = vld [vmem:[%s1 + $0x1c8] sm:$0xff]
  %v101 = vld [vmem:[%s1 + $0x1d0] sm:$0xff]
  %v102 = vld [vmem:[%s1 + $0x1d8] sm:$0xff]
  %v103 = vld [vmem:[%s1 + $0x1e0] sm:$0xff]
  %v104 = vld [vmem:[%s1 + $0x1e8] sm:$0xff]
  %v105 = vld [vmem:[%s1 + $0x1f0] sm:$0xff]
  %v106 = vld [vmem:[%s1 + $0x1f8] sm:$0xff]
  %v107 = vld [vmem:[%s1 + $0x200] sm:$0xff]
  %v108 = vld [vmem:[%s1 + $0x208] sm:$0xff]
  %v109 = vld [vmem:[%s1 + $0x210] sm:$0xff]
  %v110 = vld [vmem:[%s1 + $0x218] sm:$0xff]
  %v111 = vld [vmem:[%s1 + $0x220] sm:$0xff]
  %v112 = vld [vmem:[%s1 + $0x228] sm:$0xff]
  %v113 = vld [vmem:[%s1 + $0x230] sm:$0xff]
  %v114 = vld [vmem:[%s1 + $0x238] sm:$0xff]
  %v115 = vld [vmem:[%s1 + $0x240] sm:$0xff]
  %v116 = vld [vmem:[%s1 + $0x248] sm:$0xff]
  %v117 = vld [vmem:[%s1 + $0x250] sm:$0xff]
  %v118 = vld [vmem:[%s1 + $0x258] sm:$0xff]
  %v119 = vld [vmem:[%s1 + $0x260] sm:$0xff]
  %v120 = vld [vmem:[%s1 + $0x268] sm:$0xff]
  %v121 = vld [vmem:[%s1 + $0x270] sm:$0xff]
  %v122 = vld [vmem:[%s1 + $0x278] sm:$0xff]
  %v123 = vld [vmem:[%s1 + $0x280] sm:$0xff]
  %v124 = vld [vmem:[%s1 + $0x288] sm:$0xff]
  %v125 = vld [vmem:[%s1 + $0x290] sm:$0xff]
  %v126 = vld [vmem:[%s1 + $0x298] sm:$0xff]
  %v127 = vld [vmem:[%s1 + $0x2a0] sm:$0xff]
  %v128 = vld [vmem:[%s1 + $0x2a8] sm:$0xff]
  %v129 = vld [vmem:[%s1 + $0x2b0] sm:$0xff]
  %v130 = vld [vmem:[%s1 + $0x2b8] sm:$0xff]
  %v131 = vld [vmem:[%s1 + $0x2c0] sm:$0xff]
  %v132 = vld [vmem:[%s1 + $0x2c8] sm:$0xff]
  %v133 = vld [vmem:[%s1 + $0x2d0] sm:$0xff]
  %v134 = vld [vmem:[%s1 + $0x2d8] sm:$0xff]
  %v135 = vld [vmem:[%s1 + $0x2e0] sm:$0xff]
  %v136 = vld [vmem:[%s1 + $0x2e8] sm:$0xff]
  %v137 = vld [vmem:[%s1 + $0x2f0] sm:$0xff]
  %v138 = vld [vmem:[%s1 + $0x2f8] sm:$0xff]
  %v139 = vld [vmem:[%s1 + $0x300] sm:$0xff]
  %v140 = vld [vmem:[%s1 + $0x308] sm:$0xff]
  %v141 = vld [vmem:[%s1 + $0x310] sm:$0xff]
  %v142 = vld [vmem:[%s1 + $0x318] sm:$0xff]
  %v143 = vld [vmem:[%s1 + $0x320] sm:$0xff]
  %v144 = vld [vmem:[%s1 + $0x328] sm:$0xff]
  %v145 = vld [vmem:[%s1 + $0x330] sm:$0xff]
  %v146 = vld [vmem:[%s1 + $0x338] sm:$0xff]
  %v147 = vld [vmem:[%s1 + $0x340] sm:$0xff]
  %v148 = vld [vmem:[%s1 + $0x348] sm:$0xff]
  %v149 = vld [vmem:[%s1 + $0x350] sm:$0xff]
  %v150 = vld [vmem:[%s1 + $0x358] sm:$0xff]
  %v151 = vld [vmem:[%s1 + $0x360] sm:$0xff]
  %v152 = vld [vmem:[%s1 + $0x368] sm:$0xff]
  %v153 = vld [vmem:[%s1 + $0x370] sm:$0xff]
  %v154 = vld [vmem:[%s1 + $0x378] sm:$0xff]
  %v155 = vld [vmem:[%s1 + $0x380] sm:$0xff]
  %v156 = vld [vmem:[%s1 + $0x388] sm:$0xff]
  %v157 = vld [vmem:[%s1 + $0x390] sm:$0xff]
  %v158 = vld [vmem:[%s1 + $0x398] sm:$0xff]
  %v159 = vld [vmem:[%s1 + $0x3a0] sm:$0xff]
  %v160 = vld [vmem:[%s1 + $0x3a8] sm:$0xff]
  %v161 = vld [vmem:[%s1 + $0x3b0] sm:$0xff]
  %v162 = vld [vmem:[%s1 + $0x3b8] sm:$0xff]
  %v163 = vld [vmem:[%s1 + $0x3c0] sm:$0xff]
  %v164 = vld [vmem:[%s1 + $0x3c8] sm:$0xff]
  %v165 = vld [vmem:[%s1 + $0x3d0] sm:$0xff]
  %v166 = vld [vmem:[%s1 + $0x3d8] sm:$0xff]
  %v167 = vld [vmem:[%s1 + $0x3e0] sm:$0xff]
  %v168 = vld [vmem:[%s1 + $0x3e8] sm:$0xff]
  %v169 = vld [vmem:[%s1 + $0x3f0] sm:$0xff]
  %v170 = vld [vmem:[%s1 + $0x3f8] sm:$0xff]
  %v171 = vld [vmem:[%s1 + $0x400] sm:$0xff]
  %v172 = vld [vmem:[%s1 + $0x408] sm:$0xff]
  %v173 = vld [vmem:[%s1 + $0x410] sm:$0xff]
  %v174 = vld [vmem:[%s1 + $0x418] sm:$0xff]
  %v175 = vld [vmem:[%s1 + $0x420] sm:$0xff]
  %v176 = vld [vmem:[%s1 + $0x428] sm:$0xff]
  %v177 = vld [vmem:[%s1 + $0x430] sm:$0xff]
  %v178 = vld [vmem:[%s1 + $0x438] sm:$0xff]
  %v179 = vld [vmem:[%s1 + $0x440] sm:$0xff]
  %v180 = vld [vmem:[%s1 + $0x448] sm:$0xff]
  %v181 = vld [vmem:[%s1 + $0x450] sm:$0xff]
  %v182 = vld [vmem:[%s1 + $0x458] sm:$0xff]
  %v183 = vld [vmem:[%s1 + $0x460] sm:$0xff]
  %v184 = vld [vmem:[%s1 + $0x468] sm:$0xff]
  %v185 = vld [vmem:[%s1 + $0x470] sm:$0xff]
  %v186 = vld [vmem:[%s1 + $0x478] sm:$0xff]
  %v187 = vld [vmem:[%s1 + $0x480] sm:$0xff]
  %v188 = vld [vmem:[%s1 + $0x488] sm:$0xff]
  %v189 = vld [vmem:[%s1 + $0x490] sm:$0xff]
  %v190 = vld [vmem:[%s1 + $0x498] sm:$0xff]
  %v191 = vld [vmem:[%s1 + $0x4a0] sm:$0xff]
  %v192 = vld [vmem:[%s1 + $0x4a8] sm:$0xff]
  %v193 = vld [vmem:[%s1 + $0x4b0] sm:$0xff]
  %v194 = vld [vmem:[%s1 + $0x4b8] sm:$0xff]
  %v195 = vld [vmem:[%s1 + $0x4c0] sm:$0xff]
  %v196 = vld [vmem:[%s1 + $0x4c8] sm:$0xff]
  %v197 = vld [vmem:[%s1 + $0x4d0] sm:$0xff]
  %v198 = vld [vmem:[%s1 + $0x4d8] sm:$0xff]
  %v199 = vld [vmem:[%s1 + $0x4e0] sm:$0xff]
  %v200 = vld [vmem:[%s1 + $0x4e8] sm:$0xff]
  %v201 = vld [vmem:[%s1 + $0x4f0] sm:$0xff]
  %v202 = vld [vmem:[%s1 + $0x4f8] sm:$0xff]
  %v203 = vld [vmem:[%s1 + $0x500] sm:$0xff]
  %v204 = vld [vmem:[%s1 + $0x508] sm:$0xff]
  %v205 = vld [vmem:[%s1 + $0x510] sm:$0xff]
  %v206 = vld [vmem:[%s1 + $0x518] sm:$0xff]
  %v207 = vld [vmem:[%s1 + $0x520] sm:$0xff]
  %v208 = vld [vmem:[%s1 + $0x528] sm:$0xff]
  %v209 = vld [vmem:[%s1 + $0x530] sm:$0xff]
  %v210 = vld [vmem:[%s1 + $0x538] sm:$0xff]
  %v211 = vld [vmem:[%s1 + $0x540] sm:$0xff]
  %v212 = vld [vmem:[%s1 + $0x548] sm:$0xff]
  %v213 = vld [vmem:[%s1 + $0x550] sm:$0xff]
  %v214 = vld [vmem:[%s1 + $0x558] sm:$0xff]
  %v215 = vld [vmem:[%s1 + $0x560] sm:$0xff]
  %v216 = vld [vmem:[%s1 + $0x568] sm:$0xff]
  %v217 = vld [vmem:[%s1 + $0x570] sm:$0xff]
  %v218 = vld [vmem:[%s1 + $0x578] sm:$0xff]
  %v219 = vld [vmem:[%s1 + $0x580] sm:$0xff]
  %v220 = vld [vmem:[%s1 + $0x588] sm:$0xff]
  %v221 = vld [vmem:[%s1 + $0x590] sm:$0xff]
  %v222 = vld [vmem:[%s1 + $0x598] sm:$0xff]
  %v223 = vld [vmem:[%s1 + $0x5a0] sm:$0xff]
  %v224 = vld [vmem:[%s1 + $0x5a8] sm:$0xff]
  %v225 = vld [vmem:[%s1 + $0x5b0] sm:$0xff]
  %v226 = vld [vmem:[%s1 + $0x5b8] sm:$0xff]
  %v227 = vld [vmem:[%s1 + $0x5c0] sm:$0xff]
  %v228 = vld [vmem:[%s1 + $0x5c8] sm:$0xff]
  %v229 = vld [vmem:[%s1 + $0x5d0] sm:$0xff]
  %v230 = vld [vmem:[%s1 + $0x5d8] sm:$0xff]
  %v231 = vld [vmem:[%s1 + $0x5e0] sm:$0xff]
  %v232 = vld [vmem:[%s1 + $0x5e8] sm:$0xff]
  %v233 = vld [vmem:[%s1 + $0x5f0] sm:$0xff]
  %v234 = vld [vmem:[%s1 + $0x5f8] sm:$0xff]
  %v235 = vld [vmem:[%s1 + $0x600] sm:$0xff]
  %v236 = vld [vmem:[%s1 + $0x608] sm:$0xff]
  %v237 = vld [vmem:[%s1 + $0x610] sm:$0xff]
  %v238 = vld [vmem:[%s1 + $0x618] sm:$0xff]
  %v239 = vld [vmem:[%s1 + $0x620] sm:$0xff]
  %v240 = vld [vmem:[%s1 + $0x628] sm:$0xff]
  %v241 = vld [vmem:[%s1 + $0x630] sm:$0xff]
  %v242 = vld [vmem:[%s1 + $0x638] sm:$0xff]
  %v243 = vld [vmem:[%s1 + $0x640] sm:$0xff]
  %v244 = vld [vmem:[%s1 + $0x648] sm:$0xff]
  %v245 = vld [vmem:[%s1 + $0x650] sm:$0xff]
  %v246 = vld [vmem:[%s1 + $0x658] sm:$0xff]
  %v247 = vld [vmem:[%s1 + $0x660] sm:$0xff]
  %v248 = vld [vmem:[%s1 + $0x668] sm:$0xff]
  %v249 = vld [vmem:[%s1 + $0x670] sm:$0xff]
  %v250 = vld [vmem:[%s1 + $0x678] sm:$0xff]
  %v251 = vld [vmem:[%s1 + $0x680] sm:$0xff]
  %v252 = vld [vmem:[%s1 + $0x688] sm:$0xff]
  %v253 = vld [vmem:[%s1 + $0x690] sm:$0xff]
  %v254 = vld [vmem:[%s1 + $0x698] sm:$0xff]
  %v255 = vld [vmem:[%s1 + $0x6a0] sm:$0xff]
  %v256 = vld [vmem:[%s1 + $0x6a8] sm:$0xff]
  %v257 = vld [vmem:[%s1 + $0x6b0] sm:$0xff]
  %v258 = vld [vmem:[%s1 + $0x6b8] sm:$0xff]
  %v259 = vld [vmem:[%s1 + $0x6c0] sm:$0xff]
  %v260 = vld [vmem:[%s1 + $0x6c8] sm:$0xff]
  %v261 = vld [vmem:[%s1 + $0x6d0] sm:$0xff]
  %v262 = vld [vmem:[%s1 + $0x6d8] sm:$0xff]
  %v263 = vld [vmem:[%s1 + $0x6e0] sm:$0xff]
  %v264 = vld [vmem:[%s1 + $0x6e8] sm:$0xff]
  %v265 = vld [vmem:[%s1 + $0x6f0] sm:$0xff]
  %v266 = vld [vmem:[%s1 + $0x6f8] sm:$0xff]
  %v267 = vld [vmem:[%s1 + $0x700] sm:$0xff]
  %v268 = vld [vmem:[%s1 + $0x708] sm:$0xff]
  %v269 = vld [vmem:[%s1 + $0x710] sm:$0xff]
  %v270 = vld [vmem:[%s1 + $0x718] sm:$0xff]
  %v271 = vld [vmem:[%s1 + $0x720] sm:$0xff]
  %v272 = vld [vmem:[%s1 + $0x728] sm:$0xff]
  %v273 = vld [vmem:[%s1 + $0x730] sm:$0xff]
  %v274 = vld [vmem:[%s1 + $0x738] sm:$0xff]
  %v275 = vld [vmem:[%s1 + $0x740] sm:$0xff]
  %v276 = vld [vmem:[%s1 + $0x748] sm:$0xff]
  %v277 = vld [vmem:[%s1 + $0x750] sm:$0xff]
  %v278 = vld [vmem:[%s1 + $0x758] sm:$0xff]
  %v279 = vld [vmem:[%s1 + $0x760] sm:$0xff]
  %v280 = vld [vmem:[%s1 + $0x768] sm:$0xff]
  %v281 = vld [vmem:[%s1 + $0x770] sm:$0xff]
  %v282 = vld [vmem:[%s1 + $0x778] sm:$0xff]
  %v283 = vld [vmem:[%s1 + $0x780] sm:$0xff]
  %v284 = vld [vmem:[%s1 + $0x788] sm:$0xff]
  %v285 = vld [vmem:[%s1 + $0x790] sm:$0xff]
  %v286 = vld [vmem:[%s1 + $0x798] sm:$0xff]
  %v287 = vld [vmem:[%s1 + $0x7a0] sm:$0xff]
  %v288 = vld [vmem:[%s1 + $0x7a8] sm:$0xff]
  %v289 = vld [vmem:[%s1 + $0x7b0] sm:$0xff]
  %v290 = vld [vmem:[%s1 + $0x7b8] sm:$0xff]
  %v291 = vld [vmem:[%s1 + $0x7c0] sm:$0xff]
  %v292 = vld [vmem:[%s1 + $0x7c8] sm:$0xff]
  %v293 = vld [vmem:[%s1 + $0x7d0] sm:$0xff]
  %v294 = vld [vmem:[%s1 + $0x7d8] sm:$0xff]
  %v295 = vld [vmem:[%s1 + $0x7e0] sm:$0xff]
  %v296 = vld [vmem:[%s1 + $0x7e8] sm:$0xff]
  %v297 = vld [vmem:[%s1 + $0x7f0] sm:$0xff]
  %v298 = vld [vmem:[%s1 + $0x7f8] sm:$0xff]
  %v299 = vld [vmem:[%s2] sm:$0xf]
  %v301 = vlaneseq
  %v302 = vshrl.u32 %v301, 7
  %v303 = vsub.s32 0, %v302
  %v304 = vrot.slane %v299, %v303
  %v305 = vlaneseq
  %v306 = vshrl.u32 %v305, 7
  %v307 = vsub.s32 1, %v306
  %v308 = vrot.slane %v299, %v307
  %v309 = vlaneseq
  %v310 = vshrl.u32 %v309, 7
  %v311 = vsub.s32 2, %v310
  %v312 = vrot.slane %v299, %v311
  %v313 = vlaneseq
  %v314 = vshrl.u32 %v313, 7
  %v315 = vsub.s32 3, %v314
  %v316 = vrot.slane %v299, %v315
  %v577 = vunpack.c.l.b16 %v43
  %v578 = vunpack.c.h.b16 %v43
  %v579 = vunpack.c.l.b16 %v44
  %v580 = vunpack.c.h.b16 %v44
  %v581 = vunpack.c.l.b16 %v45
  %v582 = vunpack.c.h.b16 %v45
  %v583 = vunpack.c.l.b16 %v46
  %v584 = vunpack.c.h.b16 %v46
  %v585 = vunpack.c.l.b16 %v47
  %v586 = vunpack.c.h.b16 %v47
  %v587 = vunpack.c.l.b16 %v48
  %v588 = vunpack.c.h.b16 %v48
  %v589 = vunpack.c.l.b16 %v49
  %v590 = vunpack.c.h.b16 %v49
  %v591 = vunpack.c.l.b16 %v50
  %v592 = vunpack.c.h.b16 %v50
  %v593 = vunpack.c.l.b16 %v51
  %v594 = vunpack.c.h.b16 %v51
  %v595 = vunpack.c.l.b16 %v52
  %v596 = vunpack.c.h.b16 %v52
  %v597 = vunpack.c.l.b16 %v53
  %v598 = vunpack.c.h.b16 %v53
  %v599 = vunpack.c.l.b16 %v54
  %v600 = vunpack.c.h.b16 %v54
  %v601 = vunpack.c.l.b16 %v55
  %v602 = vunpack.c.h.b16 %v55
  %v603 = vunpack.c.l.b16 %v56
  %v604 = vunpack.c.h.b16 %v56
  %v605 = vunpack.c.l.b16 %v57
  %v606 = vunpack.c.h.b16 %v57
  %v607 = vunpack.c.l.b16 %v58
  %v608 = vunpack.c.h.b16 %v58
  %v609 = vunpack.c.l.b16 %v59
  %v610 = vunpack.c.h.b16 %v59
  %v611 = vunpack.c.l.b16 %v60
  %v612 = vunpack.c.h.b16 %v60
  %v613 = vunpack.c.l.b16 %v61
  %v614 = vunpack.c.h.b16 %v61
  %v615 = vunpack.c.l.b16 %v62
  %v616 = vunpack.c.h.b16 %v62
  %v617 = vunpack.c.l.b16 %v63
  %v618 = vunpack.c.h.b16 %v63
  %v619 = vunpack.c.l.b16 %v64
  %v620 = vunpack.c.h.b16 %v64
  %v621 = vunpack.c.l.b16 %v65
  %v622 = vunpack.c.h.b16 %v65
  %v623 = vunpack.c.l.b16 %v66
  %v624 = vunpack.c.h.b16 %v66
  %v625 = vunpack.c.l.b16 %v67
  %v626 = vunpack.c.h.b16 %v67
  %v627 = vunpack.c.l.b16 %v68
  %v628 = vunpack.c.h.b16 %v68
  %v629 = vunpack.c.l.b16 %v69
  %v630 = vunpack.c.h.b16 %v69
  %v631 = vunpack.c.l.b16 %v70
  %v632 = vunpack.c.h.b16 %v70
  %v633 = vunpack.c.l.b16 %v71
  %v634 = vunpack.c.h.b16 %v71
  %v635 = vunpack.c.l.b16 %v72
  %v636 = vunpack.c.h.b16 %v72
  %v637 = vunpack.c.l.b16 %v73
  %v638 = vunpack.c.h.b16 %v73
  %v639 = vunpack.c.l.b16 %v74
  %v640 = vunpack.c.h.b16 %v74
  %v641 = vunpack.c.l.b16 %v75
  %v642 = vunpack.c.h.b16 %v75
  %v643 = vunpack.c.l.b16 %v76
  %v644 = vunpack.c.h.b16 %v76
  %v645 = vunpack.c.l.b16 %v77
  %v646 = vunpack.c.h.b16 %v77
  %v647 = vunpack.c.l.b16 %v78
  %v648 = vunpack.c.h.b16 %v78
  %v649 = vunpack.c.l.b16 %v79
  %v650 = vunpack.c.h.b16 %v79
  %v651 = vunpack.c.l.b16 %v80
  %v652 = vunpack.c.h.b16 %v80
  %v653 = vunpack.c.l.b16 %v81
  %v654 = vunpack.c.h.b16 %v81
  %v655 = vunpack.c.l.b16 %v82
  %v656 = vunpack.c.h.b16 %v82
  %v657 = vunpack.c.l.b16 %v83
  %v658 = vunpack.c.h.b16 %v83
  %v659 = vunpack.c.l.b16 %v84
  %v660 = vunpack.c.h.b16 %v84
  %v661 = vunpack.c.l.b16 %v85
  %v662 = vunpack.c.h.b16 %v85
  %v663 = vunpack.c.l.b16 %v86
  %v664 = vunpack.c.h.b16 %v86
  %v665 = vunpack.c.l.b16 %v87
  %v666 = vunpack.c.h.b16 %v87
  %v667 = vunpack.c.l.b16 %v88
  %v668 = vunpack.c.h.b16 %v88
  %v669 = vunpack.c.l.b16 %v89
  %v670 = vunpack.c.h.b16 %v89
  %v671 = vunpack.c.l.b16 %v90
  %v672 = vunpack.c.h.b16 %v90
  %v673 = vunpack.c.l.b16 %v91
  %v674 = vunpack.c.h.b16 %v91
  %v675 = vunpack.c.l.b16 %v92
  %v676 = vunpack.c.h.b16 %v92
  %v677 = vunpack.c.l.b16 %v93
  %v678 = vunpack.c.h.b16 %v93
  %v679 = vunpack.c.l.b16 %v94
  %v680 = vunpack.c.h.b16 %v94
  %v681 = vunpack.c.l.b16 %v95
  %v682 = vunpack.c.h.b16 %v95
  %v683 = vunpack.c.l.b16 %v96
  %v684 = vunpack.c.h.b16 %v96
  %v685 = vunpack.c.l.b16 %v97
  %v686 = vunpack.c.h.b16 %v97
  %v687 = vunpack.c.l.b16 %v98
  %v688 = vunpack.c.h.b16 %v98
  %v689 = vunpack.c.l.b16 %v99
  %v690 = vunpack.c.h.b16 %v99
  %v691 = vunpack.c.l.b16 %v100
  %v692 = vunpack.c.h.b16 %v100
  %v693 = vunpack.c.l.b16 %v101
  %v694 = vunpack.c.h.b16 %v101
  %v695 = vunpack.c.l.b16 %v102
  %v696 = vunpack.c.h.b16 %v102
  %v697 = vunpack.c.l.b16 %v103
  %v698 = vunpack.c.h.b16 %v103
  %v699 = vunpack.c.l.b16 %v104
  %v700 = vunpack.c.h.b16 %v104
  %v701 = vunpack.c.l.b16 %v105
  %v702 = vunpack.c.h.b16 %v105
  %v703 = vunpack.c.l.b16 %v106
  %v704 = vunpack.c.h.b16 %v106
  %v705 = vunpack.c.l.b16 %v107
  %v706 = vunpack.c.h.b16 %v107
  %v707 = vunpack.c.l.b16 %v108
  %v708 = vunpack.c.h.b16 %v108
  %v709 = vunpack.c.l.b16 %v109
  %v710 = vunpack.c.h.b16 %v109
  %v711 = vunpack.c.l.b16 %v110
  %v712 = vunpack.c.h.b16 %v110
  %v713 = vunpack.c.l.b16 %v111
  %v714 = vunpack.c.h.b16 %v111
  %v715 = vunpack.c.l.b16 %v112
  %v716 = vunpack.c.h.b16 %v112
  %v717 = vunpack.c.l.b16 %v113
  %v718 = vunpack.c.h.b16 %v113
  %v719 = vunpack.c.l.b16 %v114
  %v720 = vunpack.c.h.b16 %v114
  %v721 = vunpack.c.l.b16 %v115
  %v722 = vunpack.c.h.b16 %v115
  %v723 = vunpack.c.l.b16 %v116
  %v724 = vunpack.c.h.b16 %v116
  %v725 = vunpack.c.l.b16 %v117
  %v726 = vunpack.c.h.b16 %v117
  %v727 = vunpack.c.l.b16 %v118
  %v728 = vunpack.c.h.b16 %v118
  %v729 = vunpack.c.l.b16 %v119
  %v730 = vunpack.c.h.b16 %v119
  %v731 = vunpack.c.l.b16 %v120
  %v732 = vunpack.c.h.b16 %v120
  %v733 = vunpack.c.l.b16 %v121
  %v734 = vunpack.c.h.b16 %v121
  %v735 = vunpack.c.l.b16 %v122
  %v736 = vunpack.c.h.b16 %v122
  %v737 = vunpack.c.l.b16 %v123
  %v738 = vunpack.c.h.b16 %v123
  %v739 = vunpack.c.l.b16 %v124
  %v740 = vunpack.c.h.b16 %v124
  %v741 = vunpack.c.l.b16 %v125
  %v742 = vunpack.c.h.b16 %v125
  %v743 = vunpack.c.l.b16 %v126
  %v744 = vunpack.c.h.b16 %v126
  %v745 = vunpack.c.l.b16 %v127
  %v746 = vunpack.c.h.b16 %v127
  %v747 = vunpack.c.l.b16 %v128
  %v748 = vunpack.c.h.b16 %v128
  %v749 = vunpack.c.l.b16 %v129
  %v750 = vunpack.c.h.b16 %v129
  %v751 = vunpack.c.l.b16 %v130
  %v752 = vunpack.c.h.b16 %v130
  %v753 = vunpack.c.l.b16 %v131
  %v754 = vunpack.c.h.b16 %v131
  %v755 = vunpack.c.l.b16 %v132
  %v756 = vunpack.c.h.b16 %v132
  %v757 = vunpack.c.l.b16 %v133
  %v758 = vunpack.c.h.b16 %v133
  %v759 = vunpack.c.l.b16 %v134
  %v760 = vunpack.c.h.b16 %v134
  %v761 = vunpack.c.l.b16 %v135
  %v762 = vunpack.c.h.b16 %v135
  %v763 = vunpack.c.l.b16 %v136
  %v764 = vunpack.c.h.b16 %v136
  %v765 = vunpack.c.l.b16 %v137
  %v766 = vunpack.c.h.b16 %v137
  %v767 = vunpack.c.l.b16 %v138
  %v768 = vunpack.c.h.b16 %v138
  %v769 = vunpack.c.l.b16 %v139
  %v770 = vunpack.c.h.b16 %v139
  %v771 = vunpack.c.l.b16 %v140
  %v772 = vunpack.c.h.b16 %v140
  %v773 = vunpack.c.l.b16 %v141
  %v774 = vunpack.c.h.b16 %v141
  %v775 = vunpack.c.l.b16 %v142
  %v776 = vunpack.c.h.b16 %v142
  %v777 = vunpack.c.l.b16 %v143
  %v778 = vunpack.c.h.b16 %v143
  %v779 = vunpack.c.l.b16 %v144
  %v780 = vunpack.c.h.b16 %v144
  %v781 = vunpack.c.l.b16 %v145
  %v782 = vunpack.c.h.b16 %v145
  %v783 = vunpack.c.l.b16 %v146
  %v784 = vunpack.c.h.b16 %v146
  %v785 = vunpack.c.l.b16 %v147
  %v786 = vunpack.c.h.b16 %v147
  %v787 = vunpack.c.l.b16 %v148
  %v788 = vunpack.c.h.b16 %v148
  %v789 = vunpack.c.l.b16 %v149
  %v790 = vunpack.c.h.b16 %v149
  %v791 = vunpack.c.l.b16 %v150
  %v792 = vunpack.c.h.b16 %v150
  %v793 = vunpack.c.l.b16 %v151
  %v794 = vunpack.c.h.b16 %v151
  %v795 = vunpack.c.l.b16 %v152
  %v796 = vunpack.c.h.b16 %v152
  %v797 = vunpack.c.l.b16 %v153
  %v798 = vunpack.c.h.b16 %v153
  %v799 = vunpack.c.l.b16 %v154
  %v800 = vunpack.c.h.b16 %v154
  %v801 = vunpack.c.l.b16 %v155
  %v802 = vunpack.c.h.b16 %v155
  %v803 = vunpack.c.l.b16 %v156
  %v804 = vunpack.c.h.b16 %v156
  %v805 = vunpack.c.l.b16 %v157
  %v806 = vunpack.c.h.b16 %v157
  %v807 = vunpack.c.l.b16 %v158
  %v808 = vunpack.c.h.b16 %v158
  %v809 = vunpack.c.l.b16 %v159
  %v810 = vunpack.c.h.b16 %v159
  %v811 = vunpack.c.l.b16 %v160
  %v812 = vunpack.c.h.b16 %v160
  %v813 = vunpack.c.l.b16 %v161
  %v814 = vunpack.c.h.b16 %v161
  %v815 = vunpack.c.l.b16 %v162
  %v816 = vunpack.c.h.b16 %v162
  %v817 = vunpack.c.l.b16 %v163
  %v818 = vunpack.c.h.b16 %v163
  %v819 = vunpack.c.l.b16 %v164
  %v820 = vunpack.c.h.b16 %v164
  %v821 = vunpack.c.l.b16 %v165
  %v822 = vunpack.c.h.b16 %v165
  %v823 = vunpack.c.l.b16 %v166
  %v824 = vunpack.c.h.b16 %v166
  %v825 = vunpack.c.l.b16 %v167
  %v826 = vunpack.c.h.b16 %v167
  %v827 = vunpack.c.l.b16 %v168
  %v828 = vunpack.c.h.b16 %v168
  %v829 = vunpack.c.l.b16 %v169
  %v830 = vunpack.c.h.b16 %v169
  %v831 = vunpack.c.l.b16 %v170
  %v832 = vunpack.c.h.b16 %v170
  %v833 = vunpack.c.l.b16 %v171
  %v834 = vunpack.c.h.b16 %v171
  %v835 = vunpack.c.l.b16 %v172
  %v836 = vunpack.c.h.b16 %v172
  %v837 = vunpack.c.l.b16 %v173
  %v838 = vunpack.c.h.b16 %v173
  %v839 = vunpack.c.l.b16 %v174
  %v840 = vunpack.c.h.b16 %v174
  %v841 = vunpack.c.l.b16 %v175
  %v842 = vunpack.c.h.b16 %v175
  %v843 = vunpack.c.l.b16 %v176
  %v844 = vunpack.c.h.b16 %v176
  %v845 = vunpack.c.l.b16 %v177
  %v846 = vunpack.c.h.b16 %v177
  %v847 = vunpack.c.l.b16 %v178
  %v848 = vunpack.c.h.b16 %v178
  %v849 = vunpack.c.l.b16 %v179
  %v850 = vunpack.c.h.b16 %v179
  %v851 = vunpack.c.l.b16 %v180
  %v852 = vunpack.c.h.b16 %v180
  %v853 = vunpack.c.l.b16 %v181
  %v854 = vunpack.c.h.b16 %v181
  %v855 = vunpack.c.l.b16 %v182
  %v856 = vunpack.c.h.b16 %v182
  %v857 = vunpack.c.l.b16 %v183
  %v858 = vunpack.c.h.b16 %v183
  %v859 = vunpack.c.l.b16 %v184
  %v860 = vunpack.c.h.b16 %v184
  %v861 = vunpack.c.l.b16 %v185
  %v862 = vunpack.c.h.b16 %v185
  %v863 = vunpack.c.l.b16 %v186
  %v864 = vunpack.c.h.b16 %v186
  %v865 = vunpack.c.l.b16 %v187
  %v866 = vunpack.c.h.b16 %v187
  %v867 = vunpack.c.l.b16 %v188
  %v868 = vunpack.c.h.b16 %v188
  %v869 = vunpack.c.l.b16 %v189
  %v870 = vunpack.c.h.b16 %v189
  %v871 = vunpack.c.l.b16 %v190
  %v872 = vunpack.c.h.b16 %v190
  %v873 = vunpack.c.l.b16 %v191
  %v874 = vunpack.c.h.b16 %v191
  %v875 = vunpack.c.l.b16 %v192
  %v876 = vunpack.c.h.b16 %v192
  %v877 = vunpack.c.l.b16 %v193
  %v878 = vunpack.c.h.b16 %v193
  %v879 = vunpack.c.l.b16 %v194
  %v880 = vunpack.c.h.b16 %v194
  %v881 = vunpack.c.l.b16 %v195
  %v882 = vunpack.c.h.b16 %v195
  %v883 = vunpack.c.l.b16 %v196
  %v884 = vunpack.c.h.b16 %v196
  %v885 = vunpack.c.l.b16 %v197
  %v886 = vunpack.c.h.b16 %v197
  %v887 = vunpack.c.l.b16 %v198
  %v888 = vunpack.c.h.b16 %v198
  %v889 = vunpack.c.l.b16 %v199
  %v890 = vunpack.c.h.b16 %v199
  %v891 = vunpack.c.l.b16 %v200
  %v892 = vunpack.c.h.b16 %v200
  %v893 = vunpack.c.l.b16 %v201
  %v894 = vunpack.c.h.b16 %v201
  %v895 = vunpack.c.l.b16 %v202
  %v896 = vunpack.c.h.b16 %v202
  %v897 = vunpack.c.l.b16 %v203
  %v898 = vunpack.c.h.b16 %v203
  %v899 = vunpack.c.l.b16 %v204
  %v900 = vunpack.c.h.b16 %v204
  %v901 = vunpack.c.l.b16 %v205
  %v902 = vunpack.c.h.b16 %v205
  %v903 = vunpack.c.l.b16 %v206
  %v904 = vunpack.c.h.b16 %v206
  %v905 = vunpack.c.l.b16 %v207
  %v906 = vunpack.c.h.b16 %v207
  %v907 = vunpack.c.l.b16 %v208
  %v908 = vunpack.c.h.b16 %v208
  %v909 = vunpack.c.l.b16 %v209
  %v910 = vunpack.c.h.b16 %v209
  %v911 = vunpack.c.l.b16 %v210
  %v912 = vunpack.c.h.b16 %v210
  %v913 = vunpack.c.l.b16 %v211
  %v914 = vunpack.c.h.b16 %v211
  %v915 = vunpack.c.l.b16 %v212
  %v916 = vunpack.c.h.b16 %v212
  %v917 = vunpack.c.l.b16 %v213
  %v918 = vunpack.c.h.b16 %v213
  %v919 = vunpack.c.l.b16 %v214
  %v920 = vunpack.c.h.b16 %v214
  %v921 = vunpack.c.l.b16 %v215
  %v922 = vunpack.c.h.b16 %v215
  %v923 = vunpack.c.l.b16 %v216
  %v924 = vunpack.c.h.b16 %v216
  %v925 = vunpack.c.l.b16 %v217
  %v926 = vunpack.c.h.b16 %v217
  %v927 = vunpack.c.l.b16 %v218
  %v928 = vunpack.c.h.b16 %v218
  %v929 = vunpack.c.l.b16 %v219
  %v930 = vunpack.c.h.b16 %v219
  %v931 = vunpack.c.l.b16 %v220
  %v932 = vunpack.c.h.b16 %v220
  %v933 = vunpack.c.l.b16 %v221
  %v934 = vunpack.c.h.b16 %v221
  %v935 = vunpack.c.l.b16 %v222
  %v936 = vunpack.c.h.b16 %v222
  %v937 = vunpack.c.l.b16 %v223
  %v938 = vunpack.c.h.b16 %v223
  %v939 = vunpack.c.l.b16 %v224
  %v940 = vunpack.c.h.b16 %v224
  %v941 = vunpack.c.l.b16 %v225
  %v942 = vunpack.c.h.b16 %v225
  %v943 = vunpack.c.l.b16 %v226
  %v944 = vunpack.c.h.b16 %v226
  %v945 = vunpack.c.l.b16 %v227
  %v946 = vunpack.c.h.b16 %v227
  %v947 = vunpack.c.l.b16 %v228
  %v948 = vunpack.c.h.b16 %v228
  %v949 = vunpack.c.l.b16 %v229
  %v950 = vunpack.c.h.b16 %v229
  %v951 = vunpack.c.l.b16 %v230
  %v952 = vunpack.c.h.b16 %v230
  %v953 = vunpack.c.l.b16 %v231
  %v954 = vunpack.c.h.b16 %v231
  %v955 = vunpack.c.l.b16 %v232
  %v956 = vunpack.c.h.b16 %v232
  %v957 = vunpack.c.l.b16 %v233
  %v958 = vunpack.c.h.b16 %v233
  %v959 = vunpack.c.l.b16 %v234
  %v960 = vunpack.c.h.b16 %v234
  %v961 = vunpack.c.l.b16 %v235
  %v962 = vunpack.c.h.b16 %v235
  %v963 = vunpack.c.l.b16 %v236
  %v964 = vunpack.c.h.b16 %v236
  %v965 = vunpack.c.l.b16 %v237
  %v966 = vunpack.c.h.b16 %v237
  %v967 = vunpack.c.l.b16 %v238
  %v968 = vunpack.c.h.b16 %v238
  %v969 = vunpack.c.l.b16 %v239
  %v970 = vunpack.c.h.b16 %v239
  %v971 = vunpack.c.l.b16 %v240
  %v972 = vunpack.c.h.b16 %v240
  %v973 = vunpack.c.l.b16 %v241
  %v974 = vunpack.c.h.b16 %v241
  %v975 = vunpack.c.l.b16 %v242
  %v976 = vunpack.c.h.b16 %v242
  %v977 = vunpack.c.l.b16 %v243
  %v978 = vunpack.c.h.b16 %v243
  %v979 = vunpack.c.l.b16 %v244
  %v980 = vunpack.c.h.b16 %v244
  %v981 = vunpack.c.l.b16 %v245
  %v982 = vunpack.c.h.b16 %v245
  %v983 = vunpack.c.l.b16 %v246
  %v984 = vunpack.c.h.b16 %v246
  %v985 = vunpack.c.l.b16 %v247
  %v986 = vunpack.c.h.b16 %v247
  %v987 = vunpack.c.l.b16 %v248
  %v988 = vunpack.c.h.b16 %v248
  %v989 = vunpack.c.l.b16 %v249
  %v990 = vunpack.c.h.b16 %v249
  %v991 = vunpack.c.l.b16 %v250
  %v992 = vunpack.c.h.b16 %v250
  %v993 = vunpack.c.l.b16 %v251
  %v994 = vunpack.c.h.b16 %v251
  %v995 = vunpack.c.l.b16 %v252
  %v996 = vunpack.c.h.b16 %v252
  %v997 = vunpack.c.l.b16 %v253
  %v998 = vunpack.c.h.b16 %v253
  %v999 = vunpack.c.l.b16 %v254
  %v1000 = vunpack.c.h.b16 %v254
  %v1001 = vunpack.c.l.b16 %v255
  %v1002 = vunpack.c.h.b16 %v255
  %v1003 = vunpack.c.l.b16 %v256
  %v1004 = vunpack.c.h.b16 %v256
  %v1005 = vunpack.c.l.b16 %v257
  %v1006 = vunpack.c.h.b16 %v257
  %v1007 = vunpack.c.l.b16 %v258
  %v1008 = vunpack.c.h.b16 %v258
  %v1009 = vunpack.c.l.b16 %v259
  %v1010 = vunpack.c.h.b16 %v259
  %v1011 = vunpack.c.l.b16 %v260
  %v1012 = vunpack.c.h.b16 %v260
  %v1013 = vunpack.c.l.b16 %v261
  %v1014 = vunpack.c.h.b16 %v261
  %v1015 = vunpack.c.l.b16 %v262
  %v1016 = vunpack.c.h.b16 %v262
  %v1017 = vunpack.c.l.b16 %v263
  %v1018 = vunpack.c.h.b16 %v263
  %v1019 = vunpack.c.l.b16 %v264
  %v1020 = vunpack.c.h.b16 %v264
  %v1021 = vunpack.c.l.b16 %v265
  %v1022 = vunpack.c.h.b16 %v265
  %v1023 = vunpack.c.l.b16 %v266
  %v1024 = vunpack.c.h.b16 %v266
  %v1025 = vunpack.c.l.b16 %v267
  %v1026 = vunpack.c.h.b16 %v267
  %v1027 = vunpack.c.l.b16 %v268
  %v1028 = vunpack.c.h.b16 %v268
  %v1029 = vunpack.c.l.b16 %v269
  %v1030 = vunpack.c.h.b16 %v269
  %v1031 = vunpack.c.l.b16 %v270
  %v1032 = vunpack.c.h.b16 %v270
  %v1033 = vunpack.c.l.b16 %v271
  %v1034 = vunpack.c.h.b16 %v271
  %v1035 = vunpack.c.l.b16 %v272
  %v1036 = vunpack.c.h.b16 %v272
  %v1037 = vunpack.c.l.b16 %v273
  %v1038 = vunpack.c.h.b16 %v273
  %v1039 = vunpack.c.l.b16 %v274
  %v1040 = vunpack.c.h.b16 %v274
  %v1041 = vunpack.c.l.b16 %v275
  %v1042 = vunpack.c.h.b16 %v275
  %v1043 = vunpack.c.l.b16 %v276
  %v1044 = vunpack.c.h.b16 %v276
  %v1045 = vunpack.c.l.b16 %v277
  %v1046 = vunpack.c.h.b16 %v277
  %v1047 = vunpack.c.l.b16 %v278
  %v1048 = vunpack.c.h.b16 %v278
  %v1049 = vunpack.c.l.b16 %v279
  %v1050 = vunpack.c.h.b16 %v279
  %v1051 = vunpack.c.l.b16 %v280
  %v1052 = vunpack.c.h.b16 %v280
  %v1053 = vunpack.c.l.b16 %v281
  %v1054 = vunpack.c.h.b16 %v281
  %v1055 = vunpack.c.l.b16 %v282
  %v1056 = vunpack.c.h.b16 %v282
  %v1057 = vunpack.c.l.b16 %v283
  %v1058 = vunpack.c.h.b16 %v283
  %v1059 = vunpack.c.l.b16 %v284
  %v1060 = vunpack.c.h.b16 %v284
  %v1061 = vunpack.c.l.b16 %v285
  %v1062 = vunpack.c.h.b16 %v285
  %v1063 = vunpack.c.l.b16 %v286
  %v1064 = vunpack.c.h.b16 %v286
  %v1065 = vunpack.c.l.b16 %v287
  %v1066 = vunpack.c.h.b16 %v287
  %v1067 = vunpack.c.l.b16 %v288
  %v1068 = vunpack.c.h.b16 %v288
  %v1069 = vunpack.c.l.b16 %v289
  %v1070 = vunpack.c.h.b16 %v289
  %v1071 = vunpack.c.l.b16 %v290
  %v1072 = vunpack.c.h.b16 %v290
  %v1073 = vunpack.c.l.b16 %v291
  %v1074 = vunpack.c.h.b16 %v291
  %v1075 = vunpack.c.l.b16 %v292
  %v1076 = vunpack.c.h.b16 %v292
  %v1077 = vunpack.c.l.b16 %v293
  %v1078 = vunpack.c.h.b16 %v293
  %v1079 = vunpack.c.l.b16 %v294
  %v1080 = vunpack.c.h.b16 %v294
  %v1081 = vunpack.c.l.b16 %v295
  %v1082 = vunpack.c.h.b16 %v295
  %v1083 = vunpack.c.l.b16 %v296
  %v1084 = vunpack.c.h.b16 %v296
  %v1085 = vunpack.c.l.b16 %v297
  %v1086 = vunpack.c.h.b16 %v297
  %v1087 = vunpack.c.l.b16 %v298
  %v1088 = vunpack.c.h.b16 %v298
  %v1089 = vpack.c.b16 %v581, %v577
  %v1090 = vpack.c.b16 %v582, %v578
  %v1091 = vpack.c.b16 %v583, %v579
  %v1092 = vpack.c.b16 %v584, %v580
  %v1093 = vpack.c.b16 %v589, %v585
  %v1094 = vpack.c.b16 %v590, %v586
  %v1095 = vpack.c.b16 %v591, %v587
  %v1096 = vpack.c.b16 %v592, %v588
  %v1097 = vpack.c.b16 %v597, %v593
  %v1098 = vpack.c.b16 %v598, %v594
  %v1099 = vpack.c.b16 %v599, %v595
  %v1100 = vpack.c.b16 %v600, %v596
  %v1101 = vpack.c.b16 %v605, %v601
  %v1102 = vpack.c.b16 %v606, %v602
  %v1103 = vpack.c.b16 %v607, %v603
  %v1104 = vpack.c.b16 %v608, %v604
  %v1105 = vpack.c.b16 %v613, %v609
  %v1106 = vpack.c.b16 %v614, %v610
  %v1107 = vpack.c.b16 %v615, %v611
  %v1108 = vpack.c.b16 %v616, %v612
  %v1109 = vpack.c.b16 %v621, %v617
  %v1110 = vpack.c.b16 %v622, %v618
  %v1111 = vpack.c.b16 %v623, %v619
  %v1112 = vpack.c.b16 %v624, %v620
  %v1113 = vpack.c.b16 %v629, %v625
  %v1114 = vpack.c.b16 %v630, %v626
  %v1115 = vpack.c.b16 %v631, %v627
  %v1116 = vpack.c.b16 %v632, %v628
  %v1117 = vpack.c.b16 %v637, %v633
  %v1118 = vpack.c.b16 %v638, %v634
  %v1119 = vpack.c.b16 %v639, %v635
  %v1120 = vpack.c.b16 %v640, %v636
  %v1121 = vpack.c.b16 %v645, %v641
  %v1122 = vpack.c.b16 %v646, %v642
  %v1123 = vpack.c.b16 %v647, %v643
  %v1124 = vpack.c.b16 %v648, %v644
  %v1125 = vpack.c.b16 %v653, %v649
  %v1126 = vpack.c.b16 %v654, %v650
  %v1127 = vpack.c.b16 %v655, %v651
  %v1128 = vpack.c.b16 %v656, %v652
  %v1129 = vpack.c.b16 %v661, %v657
  %v1130 = vpack.c.b16 %v662, %v658
  %v1131 = vpack.c.b16 %v663, %v659
  %v1132 = vpack.c.b16 %v664, %v660
  %v1133 = vpack.c.b16 %v669, %v665
  %v1134 = vpack.c.b16 %v670, %v666
  %v1135 = vpack.c.b16 %v671, %v667
  %v1136 = vpack.c.b16 %v672, %v668
  %v1137 = vpack.c.b16 %v677, %v673
  %v1138 = vpack.c.b16 %v678, %v674
  %v1139 = vpack.c.b16 %v679, %v675
  %v1140 = vpack.c.b16 %v680, %v676
  %v1141 = vpack.c.b16 %v685, %v681
  %v1142 = vpack.c.b16 %v686, %v682
  %v1143 = vpack.c.b16 %v687, %v683
  %v1144 = vpack.c.b16 %v688, %v684
  %v1145 = vpack.c.b16 %v693, %v689
  %v1146 = vpack.c.b16 %v694, %v690
  %v1147 = vpack.c.b16 %v695, %v691
  %v1148 = vpack.c.b16 %v696, %v692
  %v1149 = vpack.c.b16 %v701, %v697
  %v1150 = vpack.c.b16 %v702, %v698
  %v1151 = vpack.c.b16 %v703, %v699
  %v1152 = vpack.c.b16 %v704, %v700
  %v1153 = vpack.c.b16 %v709, %v705
  %v1154 = vpack.c.b16 %v710, %v706
  %v1155 = vpack.c.b16 %v711, %v707
  %v1156 = vpack.c.b16 %v712, %v708
  %v1157 = vpack.c.b16 %v717, %v713
  %v1158 = vpack.c.b16 %v718, %v714
  %v1159 = vpack.c.b16 %v719, %v715
  %v1160 = vpack.c.b16 %v720, %v716
  %v1161 = vpack.c.b16 %v725, %v721
  %v1162 = vpack.c.b16 %v726, %v722
  %v1163 = vpack.c.b16 %v727, %v723
  %v1164 = vpack.c.b16 %v728, %v724
  %v1165 = vpack.c.b16 %v733, %v729
  %v1166 = vpack.c.b16 %v734, %v730
  %v1167 = vpack.c.b16 %v735, %v731
  %v1168 = vpack.c.b16 %v736, %v732
  %v1169 = vpack.c.b16 %v741, %v737
  %v1170 = vpack.c.b16 %v742, %v738
  %v1171 = vpack.c.b16 %v743, %v739
  %v1172 = vpack.c.b16 %v744, %v740
  %v1173 = vpack.c.b16 %v749, %v745
  %v1174 = vpack.c.b16 %v750, %v746
  %v1175 = vpack.c.b16 %v751, %v747
  %v1176 = vpack.c.b16 %v752, %v748
  %v1177 = vpack.c.b16 %v757, %v753
  %v1178 = vpack.c.b16 %v758, %v754
  %v1179 = vpack.c.b16 %v759, %v755
  %v1180 = vpack.c.b16 %v760, %v756
  %v1181 = vpack.c.b16 %v765, %v761
  %v1182 = vpack.c.b16 %v766, %v762
  %v1183 = vpack.c.b16 %v767, %v763
  %v1184 = vpack.c.b16 %v768, %v764
  %v1185 = vpack.c.b16 %v773, %v769
  %v1186 = vpack.c.b16 %v774, %v770
  %v1187 = vpack.c.b16 %v775, %v771
  %v1188 = vpack.c.b16 %v776, %v772
  %v1189 = vpack.c.b16 %v781, %v777
  %v1190 = vpack.c.b16 %v782, %v778
  %v1191 = vpack.c.b16 %v783, %v779
  %v1192 = vpack.c.b16 %v784, %v780
  %v1193 = vpack.c.b16 %v789, %v785
  %v1194 = vpack.c.b16 %v790, %v786
  %v1195 = vpack.c.b16 %v791, %v787
  %v1196 = vpack.c.b16 %v792, %v788
  %v1197 = vpack.c.b16 %v797, %v793
  %v1198 = vpack.c.b16 %v798, %v794
  %v1199 = vpack.c.b16 %v799, %v795
  %v1200 = vpack.c.b16 %v800, %v796
  %v1201 = vpack.c.b16 %v805, %v801
  %v1202 = vpack.c.b16 %v806, %v802
  %v1203 = vpack.c.b16 %v807, %v803
  %v1204 = vpack.c.b16 %v808, %v804
  %v1205 = vpack.c.b16 %v813, %v809
  %v1206 = vpack.c.b16 %v814, %v810
  %v1207 = vpack.c.b16 %v815, %v811
  %v1208 = vpack.c.b16 %v816, %v812
  %v1209 = vpack.c.b16 %v821, %v817
  %v1210 = vpack.c.b16 %v822, %v818
  %v1211 = vpack.c.b16 %v823, %v819
  %v1212 = vpack.c.b16 %v824, %v820
  %v1213 = vpack.c.b16 %v829, %v825
  %v1214 = vpack.c.b16 %v830, %v826
  %v1215 = vpack.c.b16 %v831, %v827
  %v1216 = vpack.c.b16 %v832, %v828
  %v1217 = vpack.c.b16 %v837, %v833
  %v1218 = vpack.c.b16 %v838, %v834
  %v1219 = vpack.c.b16 %v839, %v835
  %v1220 = vpack.c.b16 %v840, %v836
  %v1221 = vpack.c.b16 %v845, %v841
  %v1222 = vpack.c.b16 %v846, %v842
  %v1223 = vpack.c.b16 %v847, %v843
  %v1224 = vpack.c.b16 %v848, %v844
  %v1225 = vpack.c.b16 %v853, %v849
  %v1226 = vpack.c.b16 %v854, %v850
  %v1227 = vpack.c.b16 %v855, %v851
  %v1228 = vpack.c.b16 %v856, %v852
  %v1229 = vpack.c.b16 %v861, %v857
  %v1230 = vpack.c.b16 %v862, %v858
  %v1231 = vpack.c.b16 %v863, %v859
  %v1232 = vpack.c.b16 %v864, %v860
  %v1233 = vpack.c.b16 %v869, %v865
  %v1234 = vpack.c.b16 %v870, %v866
  %v1235 = vpack.c.b16 %v871, %v867
  %v1236 = vpack.c.b16 %v872, %v868
  %v1237 = vpack.c.b16 %v877, %v873
  %v1238 = vpack.c.b16 %v878, %v874
  %v1239 = vpack.c.b16 %v879, %v875
  %v1240 = vpack.c.b16 %v880, %v876
  %v1241 = vpack.c.b16 %v885, %v881
  %v1242 = vpack.c.b16 %v886, %v882
  %v1243 = vpack.c.b16 %v887, %v883
  %v1244 = vpack.c.b16 %v888, %v884
  %v1245 = vpack.c.b16 %v893, %v889
  %v1246 = vpack.c.b16 %v894, %v890
  %v1247 = vpack.c.b16 %v895, %v891
  %v1248 = vpack.c.b16 %v896, %v892
  %v1249 = vpack.c.b16 %v901, %v897
  %v1250 = vpack.c.b16 %v902, %v898
  %v1251 = vpack.c.b16 %v903, %v899
  %v1252 = vpack.c.b16 %v904, %v900
  %v1253 = vpack.c.b16 %v909, %v905
  %v1254 = vpack.c.b16 %v910, %v906
  %v1255 = vpack.c.b16 %v911, %v907
  %v1256 = vpack.c.b16 %v912, %v908
  %v1257 = vpack.c.b16 %v917, %v913
  %v1258 = vpack.c.b16 %v918, %v914
  %v1259 = vpack.c.b16 %v919, %v915
  %v1260 = vpack.c.b16 %v920, %v916
  %v1261 = vpack.c.b16 %v925, %v921
  %v1262 = vpack.c.b16 %v926, %v922
  %v1263 = vpack.c.b16 %v927, %v923
  %v1264 = vpack.c.b16 %v928, %v924
  %v1265 = vpack.c.b16 %v933, %v929
  %v1266 = vpack.c.b16 %v934, %v930
  %v1267 = vpack.c.b16 %v935, %v931
  %v1268 = vpack.c.b16 %v936, %v932
  %v1269 = vpack.c.b16 %v941, %v937
  %v1270 = vpack.c.b16 %v942, %v938
  %v1271 = vpack.c.b16 %v943, %v939
  %v1272 = vpack.c.b16 %v944, %v940
  %v1273 = vpack.c.b16 %v949, %v945
  %v1274 = vpack.c.b16 %v950, %v946
  %v1275 = vpack.c.b16 %v951, %v947
  %v1276 = vpack.c.b16 %v952, %v948
  %v1277 = vpack.c.b16 %v957, %v953
  %v1278 = vpack.c.b16 %v958, %v954
  %v1279 = vpack.c.b16 %v959, %v955
  %v1280 = vpack.c.b16 %v960, %v956
  %v1281 = vpack.c.b16 %v965, %v961
  %v1282 = vpack.c.b16 %v966, %v962
  %v1283 = vpack.c.b16 %v967, %v963
  %v1284 = vpack.c.b16 %v968, %v964
  %v1285 = vpack.c.b16 %v973, %v969
  %v1286 = vpack.c.b16 %v974, %v970
  %v1287 = vpack.c.b16 %v975, %v971
  %v1288 = vpack.c.b16 %v976, %v972
  %v1289 = vpack.c.b16 %v981, %v977
  %v1290 = vpack.c.b16 %v982, %v978
  %v1291 = vpack.c.b16 %v983, %v979
  %v1292 = vpack.c.b16 %v984, %v980
  %v1293 = vpack.c.b16 %v989, %v985
  %v1294 = vpack.c.b16 %v990, %v986
  %v1295 = vpack.c.b16 %v991, %v987
  %v1296 = vpack.c.b16 %v992, %v988
  %v1297 = vpack.c.b16 %v997, %v993
  %v1298 = vpack.c.b16 %v998, %v994
  %v1299 = vpack.c.b16 %v999, %v995
  %v1300 = vpack.c.b16 %v1000, %v996
  %v1301 = vpack.c.b16 %v1005, %v1001
  %v1302 = vpack.c.b16 %v1006, %v1002
  %v1303 = vpack.c.b16 %v1007, %v1003
  %v1304 = vpack.c.b16 %v1008, %v1004
  %v1305 = vpack.c.b16 %v1013, %v1009
  %v1306 = vpack.c.b16 %v1014, %v1010
  %v1307 = vpack.c.b16 %v1015, %v1011
  %v1308 = vpack.c.b16 %v1016, %v1012
  %v1309 = vpack.c.b16 %v1021, %v1017
  %v1310 = vpack.c.b16 %v1022, %v1018
  %v1311 = vpack.c.b16 %v1023, %v1019
  %v1312 = vpack.c.b16 %v1024, %v1020
  %v1313 = vpack.c.b16 %v1029, %v1025
  %v1314 = vpack.c.b16 %v1030, %v1026
  %v1315 = vpack.c.b16 %v1031, %v1027
  %v1316 = vpack.c.b16 %v1032, %v1028
  %v1317 = vpack.c.b16 %v1037, %v1033
  %v1318 = vpack.c.b16 %v1038, %v1034
  %v1319 = vpack.c.b16 %v1039, %v1035
  %v1320 = vpack.c.b16 %v1040, %v1036
  %v1321 = vpack.c.b16 %v1045, %v1041
  %v1322 = vpack.c.b16 %v1046, %v1042
  %v1323 = vpack.c.b16 %v1047, %v1043
  %v1324 = vpack.c.b16 %v1048, %v1044
  %v1325 = vpack.c.b16 %v1053, %v1049
  %v1326 = vpack.c.b16 %v1054, %v1050
  %v1327 = vpack.c.b16 %v1055, %v1051
  %v1328 = vpack.c.b16 %v1056, %v1052
  %v1329 = vpack.c.b16 %v1061, %v1057
  %v1330 = vpack.c.b16 %v1062, %v1058
  %v1331 = vpack.c.b16 %v1063, %v1059
  %v1332 = vpack.c.b16 %v1064, %v1060
  %v1333 = vpack.c.b16 %v1069, %v1065
  %v1334 = vpack.c.b16 %v1070, %v1066
  %v1335 = vpack.c.b16 %v1071, %v1067
  %v1336 = vpack.c.b16 %v1072, %v1068
  %v1337 = vpack.c.b16 %v1077, %v1073
  %v1338 = vpack.c.b16 %v1078, %v1074
  %v1339 = vpack.c.b16 %v1079, %v1075
  %v1340 = vpack.c.b16 %v1080, %v1076
  %v1341 = vpack.c.b16 %v1085, %v1081
  %v1342 = vpack.c.b16 %v1086, %v1082
  %v1343 = vpack.c.b16 %v1087, %v1083
  %v1344 = vpack.c.b16 %v1088, %v1084
  %1601 = vmatprep.subr.bf16.mxu0 %v1118
  %1602 = vmatpush1.bf16.msra.mxu0 %v1117
  %1603 = vmatprep.subr.bf16.mxu0 %v1114
  %1604 = vmatpush1.bf16.msra.mxu0 %v1113
  %1605 = vmatprep.subr.bf16.mxu0 %v1110
  %1606 = vmatpush1.bf16.msra.mxu0 %v1109
  %1607 = vmatprep.subr.bf16.mxu0 %v1106
  %1608 = vmatpush1.bf16.msra.mxu0 %v1105
  %1609 = vmatprep.subr.bf16.mxu0 %v1102
  %1610 = vmatpush1.bf16.msra.mxu0 %v1101
  %1611 = vmatprep.subr.bf16.mxu0 %v1098
  %1612 = vmatpush1.bf16.msra.mxu0 %v1097
  %1613 = vmatprep.subr.bf16.mxu0 %v1094
  %1614 = vmatpush1.bf16.msra.mxu0 %v1093
  %1615 = vmatprep.subr.bf16.mxu0 %v1090
  %1616 = vmatpush1.bf16.msra.mxu0 %v1089
  %1617 = vmatprep.subr.bf16.mxu0 %v1150
  %1618 = vmatpush2.bf16.msra.mxu0 %v1149
  %1619 = vmatprep.subr.bf16.mxu0 %v1146
  %1620 = vmatpush2.bf16.msra.mxu0 %v1145
  %1621 = vmatprep.subr.bf16.mxu0 %v1142
  %1622 = vmatpush2.bf16.msra.mxu0 %v1141
  %1623 = vmatprep.subr.bf16.mxu0 %v1138
  %1624 = vmatpush2.bf16.msra.mxu0 %v1137
  %1625 = vmatprep.subr.bf16.mxu0 %v1134
  %1626 = vmatpush2.bf16.msra.mxu0 %v1133
  %1627 = vmatprep.subr.bf16.mxu0 %v1130
  %1628 = vmatpush2.bf16.msra.mxu0 %v1129
  %1629 = vmatprep.subr.bf16.mxu0 %v1126
  %1630 = vmatpush2.bf16.msra.mxu0 %v1125
  %1631 = vmatprep.subr.bf16.mxu0 %v1122
  %1632 = vmatpush2.bf16.msra.mxu0 %v1121
  %1633 = vmatprep.mubr.bf16.mxu0 %v36
  %1634 = vmatmul.mubr.bf16.gmra.mxu0 %v35
  %v1635 = vpop.f32.mrf.mxu0
  %v1636 = vadd.f32 %v304, %v1635
  %v1637 = vpop.f32.mrf.mxu0
  %v1638 = vadd.f32 %v308, %v1637
  %v1639 = vpop.f32.mrf.mxu0
  %v1640 = vpop.f32.mrf.mxu0
  %1641 = vdwg.mxu0
  %1642 = vmatprep.subr.bf16.mxu0 %v1182
  %1643 = vmatpush1.bf16.msra.mxu0 %v1181
  %1644 = vmatprep.subr.bf16.mxu0 %v1178
  %1645 = vmatpush1.bf16.msra.mxu0 %v1177
  %1646 = vmatprep.subr.bf16.mxu0 %v1174
  %1647 = vmatpush1.bf16.msra.mxu0 %v1173
  %1648 = vmatprep.subr.bf16.mxu0 %v1170
  %1649 = vmatpush1.bf16.msra.mxu0 %v1169
  %1650 = vmatprep.subr.bf16.mxu0 %v1166
  %1651 = vmatpush1.bf16.msra.mxu0 %v1165
  %1652 = vmatprep.subr.bf16.mxu0 %v1162
  %1653 = vmatpush1.bf16.msra.mxu0 %v1161
  %1654 = vmatprep.subr.bf16.mxu0 %v1158
  %1655 = vmatpush1.bf16.msra.mxu0 %v1157
  %1656 = vmatprep.subr.bf16.mxu0 %v1154
  %1657 = vmatpush1.bf16.msra.mxu0 %v1153
  %1658 = vmatprep.subr.bf16.mxu0 %v1214
  %1659 = vmatpush2.bf16.msra.mxu0 %v1213
  %1660 = vmatprep.subr.bf16.mxu0 %v1210
  %1661 = vmatpush2.bf16.msra.mxu0 %v1209
  %1662 = vmatprep.subr.bf16.mxu0 %v1206
  %1663 = vmatpush2.bf16.msra.mxu0 %v1205
  %1664 = vmatprep.subr.bf16.mxu0 %v1202
  %1665 = vmatpush2.bf16.msra.mxu0 %v1201
  %1666 = vmatprep.subr.bf16.mxu0 %v1198
  %1667 = vmatpush2.bf16.msra.mxu0 %v1197
  %1668 = vmatprep.subr.bf16.mxu0 %v1194
  %1669 = vmatpush2.bf16.msra.mxu0 %v1193
  %1670 = vmatprep.subr.bf16.mxu0 %v1190
  %1671 = vmatpush2.bf16.msra.mxu0 %v1189
  %1672 = vmatprep.subr.bf16.mxu0 %v1186
  %1673 = vmatpush2.bf16.msra.mxu0 %v1185
  %1674 = vmatprep.mubr.bf16.mxu0 %v38
  %1675 = vmatmul.mubr.bf16.gmra.mxu0 %v37
  %v1676 = vpop.f32.mrf.mxu0
  %v1677 = vadd.f32 %v1636, %v1676
  %v1678 = vpop.f32.mrf.mxu0
  %v1679 = vadd.f32 %v1638, %v1678
  %v1680 = vpop.f32.mrf.mxu0
  %v1681 = vpop.f32.mrf.mxu0
  %1682 = vdwg.mxu0
  %1683 = vmatprep.subr.bf16.mxu0 %v1246
  %1684 = vmatpush1.bf16.msra.mxu0 %v1245
  %1685 = vmatprep.subr.bf16.mxu0 %v1242
  %1686 = vmatpush1.bf16.msra.mxu0 %v1241
  %1687 = vmatprep.subr.bf16.mxu0 %v1238
  %1688 = vmatpush1.bf16.msra.mxu0 %v1237
  %1689 = vmatprep.subr.bf16.mxu0 %v1234
  %1690 = vmatpush1.bf16.msra.mxu0 %v1233
  %1691 = vmatprep.subr.bf16.mxu0 %v1230
  %1692 = vmatpush1.bf16.msra.mxu0 %v1229
  %1693 = vmatprep.subr.bf16.mxu0 %v1226
  %1694 = vmatpush1.bf16.msra.mxu0 %v1225
  %1695 = vmatprep.subr.bf16.mxu0 %v1222
  %1696 = vmatpush1.bf16.msra.mxu0 %v1221
  %1697 = vmatprep.subr.bf16.mxu0 %v1218
  %1698 = vmatpush1.bf16.msra.mxu0 %v1217
  %1699 = vmatprep.subr.bf16.mxu0 %v1278
  %1700 = vmatpush2.bf16.msra.mxu0 %v1277
  %1701 = vmatprep.subr.bf16.mxu0 %v1274
  %1702 = vmatpush2.bf16.msra.mxu0 %v1273
  %1703 = vmatprep.subr.bf16.mxu0 %v1270
  %1704 = vmatpush2.bf16.msra.mxu0 %v1269
  %1705 = vmatprep.subr.bf16.mxu0 %v1266
  %1706 = vmatpush2.bf16.msra.mxu0 %v1265
  %1707 = vmatprep.subr.bf16.mxu0 %v1262
  %1708 = vmatpush2.bf16.msra.mxu0 %v1261
  %1709 = vmatprep.subr.bf16.mxu0 %v1258
  %1710 = vmatpush2.bf16.msra.mxu0 %v1257
  %1711 = vmatprep.subr.bf16.mxu0 %v1254
  %1712 = vmatpush2.bf16.msra.mxu0 %v1253
  %1713 = vmatprep.subr.bf16.mxu0 %v1250
  %1714 = vmatpush2.bf16.msra.mxu0 %v1249
  %1715 = vmatprep.mubr.bf16.mxu0 %v40
  %1716 = vmatmul.mubr.bf16.gmra.mxu0 %v39
  %v1717 = vpop.f32.mrf.mxu0
  %v1718 = vadd.f32 %v1677, %v1717
  %v1719 = vpop.f32.mrf.mxu0
  %v1720 = vadd.f32 %v1679, %v1719
  %v1721 = vpop.f32.mrf.mxu0
  %v1722 = vpop.f32.mrf.mxu0
  %1723 = vdwg.mxu0
  %1724 = vmatprep.subr.bf16.mxu0 %v1310
  %1725 = vmatpush1.bf16.msra.mxu0 %v1309
  %1726 = vmatprep.subr.bf16.mxu0 %v1306
  %1727 = vmatpush1.bf16.msra.mxu0 %v1305
  %1728 = vmatprep.subr.bf16.mxu0 %v1302
  %1729 = vmatpush1.bf16.msra.mxu0 %v1301
  %1730 = vmatprep.subr.bf16.mxu0 %v1298
  %1731 = vmatpush1.bf16.msra.mxu0 %v1297
  %1732 = vmatprep.subr.bf16.mxu0 %v1294
  %1733 = vmatpush1.bf16.msra.mxu0 %v1293
  %1734 = vmatprep.subr.bf16.mxu0 %v1290
  %1735 = vmatpush1.bf16.msra.mxu0 %v1289
  %1736 = vmatprep.subr.bf16.mxu0 %v1286
  %1737 = vmatpush1.bf16.msra.mxu0 %v1285
  %1738 = vmatprep.subr.bf16.mxu0 %v1282
  %1739 = vmatpush1.bf16.msra.mxu0 %v1281
  %1740 = vmatprep.subr.bf16.mxu0 %v1342
  %1741 = vmatpush2.bf16.msra.mxu0 %v1341
  %1742 = vmatprep.subr.bf16.mxu0 %v1338
  %1743 = vmatpush2.bf16.msra.mxu0 %v1337
  %1744 = vmatprep.subr.bf16.mxu0 %v1334
  %1745 = vmatpush2.bf16.msra.mxu0 %v1333
  %1746 = vmatprep.subr.bf16.mxu0 %v1330
  %1747 = vmatpush2.bf16.msra.mxu0 %v1329
  %1748 = vmatprep.subr.bf16.mxu0 %v1326
  %1749 = vmatpush2.bf16.msra.mxu0 %v1325
  %1750 = vmatprep.subr.bf16.mxu0 %v1322
  %1751 = vmatpush2.bf16.msra.mxu0 %v1321
  %1752 = vmatprep.subr.bf16.mxu0 %v1318
  %1753 = vmatpush2.bf16.msra.mxu0 %v1317
  %1754 = vmatprep.subr.bf16.mxu0 %v1314
  %1755 = vmatpush2.bf16.msra.mxu0 %v1313
  %1756 = vmatprep.mubr.bf16.mxu0 %v42
  %1757 = vmatmul.mubr.bf16.gmra.mxu0 %v41
  %v1758 = vpop.f32.mrf.mxu0
  %v1759 = vadd.f32 %v1718, %v1758
  %v1760 = vpop.f32.mrf.mxu0
  %v1761 = vadd.f32 %v1720, %v1760
  %v1762 = vpop.f32.mrf.mxu0
  %v1763 = vpop.f32.mrf.mxu0
  %1764 = vdwg.mxu0
  %1765 = vmatprep.subr.bf16.mxu0 %v1120
  %1766 = vmatpush1.bf16.msra.mxu0 %v1119
  %1767 = vmatprep.subr.bf16.mxu0 %v1116
  %1768 = vmatpush1.bf16.msra.mxu0 %v1115
  %1769 = vmatprep.subr.bf16.mxu0 %v1112
  %1770 = vmatpush1.bf16.msra.mxu0 %v1111
  %1771 = vmatprep.subr.bf16.mxu0 %v1108
  %1772 = vmatpush1.bf16.msra.mxu0 %v1107
  %1773 = vmatprep.subr.bf16.mxu0 %v1104
  %1774 = vmatpush1.bf16.msra.mxu0 %v1103
  %1775 = vmatprep.subr.bf16.mxu0 %v1100
  %1776 = vmatpush1.bf16.msra.mxu0 %v1099
  %1777 = vmatprep.subr.bf16.mxu0 %v1096
  %1778 = vmatpush1.bf16.msra.mxu0 %v1095
  %1779 = vmatprep.subr.bf16.mxu0 %v1092
  %1780 = vmatpush1.bf16.msra.mxu0 %v1091
  %1781 = vmatprep.subr.bf16.mxu0 %v1152
  %1782 = vmatpush2.bf16.msra.mxu0 %v1151
  %1783 = vmatprep.subr.bf16.mxu0 %v1148
  %1784 = vmatpush2.bf16.msra.mxu0 %v1147
  %1785 = vmatprep.subr.bf16.mxu0 %v1144
  %1786 = vmatpush2.bf16.msra.mxu0 %v1143
  %1787 = vmatprep.subr.bf16.mxu0 %v1140
  %1788 = vmatpush2.bf16.msra.mxu0 %v1139
  %1789 = vmatprep.subr.bf16.mxu0 %v1136
  %1790 = vmatpush2.bf16.msra.mxu0 %v1135
  %1791 = vmatprep.subr.bf16.mxu0 %v1132
  %1792 = vmatpush2.bf16.msra.mxu0 %v1131
  %1793 = vmatprep.subr.bf16.mxu0 %v1128
  %1794 = vmatpush2.bf16.msra.mxu0 %v1127
  %1795 = vmatprep.subr.bf16.mxu0 %v1124
  %1796 = vmatpush2.bf16.msra.mxu0 %v1123
  %1797 = vmatprep.mubr.bf16.mxu0 %v36
  %1798 = vmatmul.mubr.bf16.gmra.mxu0 %v35
  %v1799 = vpop.f32.mrf.mxu0
  %v1800 = vadd.f32 %v312, %v1799
  %v1801 = vpop.f32.mrf.mxu0
  %v1802 = vadd.f32 %v316, %v1801
  %v1803 = vpop.f32.mrf.mxu0
  %v1804 = vpop.f32.mrf.mxu0
  %1805 = vdwg.mxu0
  %1806 = vmatprep.subr.bf16.mxu0 %v1184
  %1807 = vmatpush1.bf16.msra.mxu0 %v1183
  %1808 = vmatprep.subr.bf16.mxu0 %v1180
  %1809 = vmatpush1.bf16.msra.mxu0 %v1179
  %1810 = vmatprep.subr.bf16.mxu0 %v1176
  %1811 = vmatpush1.bf16.msra.mxu0 %v1175
  %1812 = vmatprep.subr.bf16.mxu0 %v1172
  %1813 = vmatpush1.bf16.msra.mxu0 %v1171
  %1814 = vmatprep.subr.bf16.mxu0 %v1168
  %1815 = vmatpush1.bf16.msra.mxu0 %v1167
  %1816 = vmatprep.subr.bf16.mxu0 %v1164
  %1817 = vmatpush1.bf16.msra.mxu0 %v1163
  %1818 = vmatprep.subr.bf16.mxu0 %v1160
  %1819 = vmatpush1.bf16.msra.mxu0 %v1159
  %1820 = vmatprep.subr.bf16.mxu0 %v1156
  %1821 = vmatpush1.bf16.msra.mxu0 %v1155
  %1822 = vmatprep.subr.bf16.mxu0 %v1216
  %1823 = vmatpush2.bf16.msra.mxu0 %v1215
  %1824 = vmatprep.subr.bf16.mxu0 %v1212
  %1825 = vmatpush2.bf16.msra.mxu0 %v1211
  %1826 = vmatprep.subr.bf16.mxu0 %v1208
  %1827 = vmatpush2.bf16.msra.mxu0 %v1207
  %1828 = vmatprep.subr.bf16.mxu0 %v1204
  %1829 = vmatpush2.bf16.msra.mxu0 %v1203
  %1830 = vmatprep.subr.bf16.mxu0 %v1200
  %1831 = vmatpush2.bf16.msra.mxu0 %v1199
  %1832 = vmatprep.subr.bf16.mxu0 %v1196
  %1833 = vmatpush2.bf16.msra.mxu0 %v1195
  %1834 = vmatprep.subr.bf16.mxu0 %v1192
  %1835 = vmatpush2.bf16.msra.mxu0 %v1191
  %1836 = vmatprep.subr.bf16.mxu0 %v1188
  %1837 = vmatpush2.bf16.msra.mxu0 %v1187
  %1838 = vmatprep.mubr.bf16.mxu0 %v38
  %1839 = vmatmul.mubr.bf16.gmra.mxu0 %v37
  %v1840 = vpop.f32.mrf.mxu0
  %v1841 = vadd.f32 %v1800, %v1840
  %v1842 = vpop.f32.mrf.mxu0
  %v1843 = vadd.f32 %v1802, %v1842
  %v1844 = vpop.f32.mrf.mxu0
  %v1845 = vpop.f32.mrf.mxu0
  %1846 = vdwg.mxu0
  %1847 = vmatprep.subr.bf16.mxu0 %v1248
  %1848 = vmatpush1.bf16.msra.mxu0 %v1247
  %1849 = vmatprep.subr.bf16.mxu0 %v1244
  %1850 = vmatpush1.bf16.msra.mxu0 %v1243
  %1851 = vmatprep.subr.bf16.mxu0 %v1240
  %1852 = vmatpush1.bf16.msra.mxu0 %v1239
  %1853 = vmatprep.subr.bf16.mxu0 %v1236
  %1854 = vmatpush1.bf16.msra.mxu0 %v1235
  %1855 = vmatprep.subr.bf16.mxu0 %v1232
  %1856 = vmatpush1.bf16.msra.mxu0 %v1231
  %1857 = vmatprep.subr.bf16.mxu0 %v1228
  %1858 = vmatpush1.bf16.msra.mxu0 %v1227
  %1859 = vmatprep.subr.bf16.mxu0 %v1224
  %1860 = vmatpush1.bf16.msra.mxu0 %v1223
  %1861 = vmatprep.subr.bf16.mxu0 %v1220
  %1862 = vmatpush1.bf16.msra.mxu0 %v1219
  %1863 = vmatprep.subr.bf16.mxu0 %v1280
  %1864 = vmatpush2.bf16.msra.mxu0 %v1279
  %1865 = vmatprep.subr.bf16.mxu0 %v1276
  %1866 = vmatpush2.bf16.msra.mxu0 %v1275
  %1867 = vmatprep.subr.bf16.mxu0 %v1272
  %1868 = vmatpush2.bf16.msra.mxu0 %v1271
  %1869 = vmatprep.subr.bf16.mxu0 %v1268
  %1870 = vmatpush2.bf16.msra.mxu0 %v1267
  %1871 = vmatprep.subr.bf16.mxu0 %v1264
  %1872 = vmatpush2.bf16.msra.mxu0 %v1263
  %1873 = vmatprep.subr.bf16.mxu0 %v1260
  %1874 = vmatpush2.bf16.msra.mxu0 %v1259
  %1875 = vmatprep.subr.bf16.mxu0 %v1256
  %1876 = vmatpush2.bf16.msra.mxu0 %v1255
  %1877 = vmatprep.subr.bf16.mxu0 %v1252
  %1878 = vmatpush2.bf16.msra.mxu0 %v1251
  %1879 = vmatprep.mubr.bf16.mxu0 %v40
  %1880 = vmatmul.mubr.bf16.gmra.mxu0 %v39
  %v1881 = vpop.f32.mrf.mxu0
  %v1882 = vadd.f32 %v1841, %v1881
  %v1883 = vpop.f32.mrf.mxu0
  %v1884 = vadd.f32 %v1843, %v1883
  %v1885 = vpop.f32.mrf.mxu0
  %v1886 = vpop.f32.mrf.mxu0
  %1887 = vdwg.mxu0
  %1888 = vmatprep.subr.bf16.mxu0 %v1312
  %1889 = vmatpush1.bf16.msra.mxu0 %v1311
  %1890 = vmatprep.subr.bf16.mxu0 %v1308
  %1891 = vmatpush1.bf16.msra.mxu0 %v1307
  %1892 = vmatprep.subr.bf16.mxu0 %v1304
  %1893 = vmatpush1.bf16.msra.mxu0 %v1303
  %1894 = vmatprep.subr.bf16.mxu0 %v1300
  %1895 = vmatpush1.bf16.msra.mxu0 %v1299
  %1896 = vmatprep.subr.bf16.mxu0 %v1296
  %1897 = vmatpush1.bf16.msra.mxu0 %v1295
  %1898 = vmatprep.subr.bf16.mxu0 %v1292
  %1899 = vmatpush1.bf16.msra.mxu0 %v1291
  %1900 = vmatprep.subr.bf16.mxu0 %v1288
  %1901 = vmatpush1.bf16.msra.mxu0 %v1287
  %1902 = vmatprep.subr.bf16.mxu0 %v1284
  %1903 = vmatpush1.bf16.msra.mxu0 %v1283
  %1904 = vmatprep.subr.bf16.mxu0 %v1344
  %1905 = vmatpush2.bf16.msra.mxu0 %v1343
  %1906 = vmatprep.subr.bf16.mxu0 %v1340
  %1907 = vmatpush2.bf16.msra.mxu0 %v1339
  %1908 = vmatprep.subr.bf16.mxu0 %v1336
  %1909 = vmatpush2.bf16.msra.mxu0 %v1335
  %1910 = vmatprep.subr.bf16.mxu0 %v1332
  %1911 = vmatpush2.bf16.msra.mxu0 %v1331
  %1912 = vmatprep.subr.bf16.mxu0 %v1328
  %1913 = vmatpush2.bf16.msra.mxu0 %v1327
  %1914 = vmatprep.subr.bf16.mxu0 %v1324
  %1915 = vmatpush2.bf16.msra.mxu0 %v1323
  %1916 = vmatprep.subr.bf16.mxu0 %v1320
  %1917 = vmatpush2.bf16.msra.mxu0 %v1319
  %1918 = vmatprep.subr.bf16.mxu0 %v1316
  %1919 = vmatpush2.bf16.msra.mxu0 %v1315
  %1920 = vmatprep.mubr.bf16.mxu0 %v42
  %1921 = vmatmul.mubr.bf16.gmra.mxu0 %v41
  %v1922 = vpop.f32.mrf.mxu0
  %v1923 = vadd.f32 %v1882, %v1922
  %v1924 = vpop.f32.mrf.mxu0
  %v1925 = vadd.f32 %v1884, %v1924
  %v1926 = vpop.f32.mrf.mxu0
  %v1927 = vpop.f32.mrf.mxu0
  %1928 = vdwg.mxu0
  %vm1929 = vcmp.gt.f32.partialorder %v1759, 0.0
  %vm1930 = vcmp.gt.f32.partialorder %v1761, 0.0
  %vm1931 = vcmp.gt.f32.partialorder %v1923, 0.0
  %vm1932 = vcmp.gt.f32.partialorder %v1925, 0.0
  %v1933 = vmul.f32 %v1759, 0.2
  %v1934 = vmul.f32 %v1761, 0.2
  %v1935 = vmul.f32 %v1923, 0.2
  %v1936 = vmul.f32 %v1925, 0.2
  %v1937 = vsel %vm1929, %v1759, %v1933
  %v1938 = vsel %vm1930, %v1761, %v1934
  %v1939 = vsel %vm1931, %v1923, %v1935
  %v1940 = vsel %vm1932, %v1925, %v1936
  %v1941 = vpack.c.bf16 %v1937, %v1937
  %v1942 = vpack.c.bf16 %v1938, %v1938
  %v1943 = vpack.c.bf16 %v1939, %v1939
  %v1944 = vpack.c.bf16 %v1940, %v1940
  %v1945 = vld [vmem:[%s3] sm:$0xff]
  %v1946 = vld [vmem:[%s3 + $0x8] sm:$0xff]
  %v1947 = vld [vmem:[%s3 + $0x10] sm:$0xff]
  %v1948 = vld [vmem:[%s3 + $0x18] sm:$0xff]
  %v1949 = vld [vmem:[%s3 + $0x20] sm:$0xff]
  %v1950 = vld [vmem:[%s3 + $0x28] sm:$0xff]
  %v1951 = vld [vmem:[%s3 + $0x30] sm:$0xff]
  %v1952 = vld [vmem:[%s3 + $0x38] sm:$0xff]
  %v1953 = vld [vmem:[%s3 + $0x40] sm:$0xff]
  %v1954 = vld [vmem:[%s3 + $0x48] sm:$0xff]
  %v1955 = vld [vmem:[%s3 + $0x50] sm:$0xff]
  %v1956 = vld [vmem:[%s3 + $0x58] sm:$0xff]
  %v1957 = vld [vmem:[%s3 + $0x60] sm:$0xff]
  %v1958 = vld [vmem:[%s3 + $0x68] sm:$0xff]
  %v1959 = vld [vmem:[%s3 + $0x70] sm:$0xff]
  %v1960 = vld [vmem:[%s3 + $0x78] sm:$0xff]
  %v1961 = vld [vmem:[%s3 + $0x80] sm:$0xff]
  %v1962 = vld [vmem:[%s3 + $0x88] sm:$0xff]
  %v1963 = vld [vmem:[%s3 + $0x90] sm:$0xff]
  %v1964 = vld [vmem:[%s3 + $0x98] sm:$0xff]
  %v1965 = vld [vmem:[%s3 + $0xa0] sm:$0xff]
  %v1966 = vld [vmem:[%s3 + $0xa8] sm:$0xff]
  %v1967 = vld [vmem:[%s3 + $0xb0] sm:$0xff]
  %v1968 = vld [vmem:[%s3 + $0xb8] sm:$0xff]
  %v1969 = vld [vmem:[%s3 + $0xc0] sm:$0xff]
  %v1970 = vld [vmem:[%s3 + $0xc8] sm:$0xff]
  %v1971 = vld [vmem:[%s3 + $0xd0] sm:$0xff]
  %v1972 = vld [vmem:[%s3 + $0xd8] sm:$0xff]
  %v1973 = vld [vmem:[%s3 + $0xe0] sm:$0xff]
  %v1974 = vld [vmem:[%s3 + $0xe8] sm:$0xff]
  %v1975 = vld [vmem:[%s3 + $0xf0] sm:$0xff]
  %v1976 = vld [vmem:[%s3 + $0xf8] sm:$0xff]
  %v1977 = vld [vmem:[%s3 + $0x100] sm:$0xff]
  %v1978 = vld [vmem:[%s3 + $0x108] sm:$0xff]
  %v1979 = vld [vmem:[%s3 + $0x110] sm:$0xff]
  %v1980 = vld [vmem:[%s3 + $0x118] sm:$0xff]
  %v1981 = vld [vmem:[%s3 + $0x120] sm:$0xff]
  %v1982 = vld [vmem:[%s3 + $0x128] sm:$0xff]
  %v1983 = vld [vmem:[%s3 + $0x130] sm:$0xff]
  %v1984 = vld [vmem:[%s3 + $0x138] sm:$0xff]
  %v1985 = vld [vmem:[%s3 + $0x140] sm:$0xff]
  %v1986 = vld [vmem:[%s3 + $0x148] sm:$0xff]
  %v1987 = vld [vmem:[%s3 + $0x150] sm:$0xff]
  %v1988 = vld [vmem:[%s3 + $0x158] sm:$0xff]
  %v1989 = vld [vmem:[%s3 + $0x160] sm:$0xff]
  %v1990 = vld [vmem:[%s3 + $0x168] sm:$0xff]
  %v1991 = vld [vmem:[%s3 + $0x170] sm:$0xff]
  %v1992 = vld [vmem:[%s3 + $0x178] sm:$0xff]
  %v1993 = vld [vmem:[%s3 + $0x180] sm:$0xff]
  %v1994 = vld [vmem:[%s3 + $0x188] sm:$0xff]
  %v1995 = vld [vmem:[%s3 + $0x190] sm:$0xff]
  %v1996 = vld [vmem:[%s3 + $0x198] sm:$0xff]
  %v1997 = vld [vmem:[%s3 + $0x1a0] sm:$0xff]
  %v1998 = vld [vmem:[%s3 + $0x1a8] sm:$0xff]
  %v1999 = vld [vmem:[%s3 + $0x1b0] sm:$0xff]
  %v2000 = vld [vmem:[%s3 + $0x1b8] sm:$0xff]
  %v2001 = vld [vmem:[%s3 + $0x1c0] sm:$0xff]
  %v2002 = vld [vmem:[%s3 + $0x1c8] sm:$0xff]
  %v2003 = vld [vmem:[%s3 + $0x1d0] sm:$0xff]
  %v2004 = vld [vmem:[%s3 + $0x1d8] sm:$0xff]
  %v2005 = vld [vmem:[%s3 + $0x1e0] sm:$0xff]
  %v2006 = vld [vmem:[%s3 + $0x1e8] sm:$0xff]
  %v2007 = vld [vmem:[%s3 + $0x1f0] sm:$0xff]
  %v2008 = vld [vmem:[%s3 + $0x1f8] sm:$0xff]
  %v2009 = vld [vmem:[%s4] sm:$0x3]
  %v2011 = vlaneseq
  %v2012 = vshrl.u32 %v2011, 7
  %v2013 = vsub.s32 0, %v2012
  %v2014 = vrot.slane %v2009, %v2013
  %v2015 = vlaneseq
  %v2016 = vshrl.u32 %v2015, 7
  %v2017 = vsub.s32 1, %v2016
  %v2018 = vrot.slane %v2009, %v2017
  %v2085 = vunpack.c.l.b16 %v1945
  %v2086 = vunpack.c.h.b16 %v1945
  %v2087 = vunpack.c.l.b16 %v1946
  %v2088 = vunpack.c.h.b16 %v1946
  %v2089 = vunpack.c.l.b16 %v1947
  %v2090 = vunpack.c.h.b16 %v1947
  %v2091 = vunpack.c.l.b16 %v1948
  %v2092 = vunpack.c.h.b16 %v1948
  %v2093 = vunpack.c.l.b16 %v1949
  %v2094 = vunpack.c.h.b16 %v1949
  %v2095 = vunpack.c.l.b16 %v1950
  %v2096 = vunpack.c.h.b16 %v1950
  %v2097 = vunpack.c.l.b16 %v1951
  %v2098 = vunpack.c.h.b16 %v1951
  %v2099 = vunpack.c.l.b16 %v1952
  %v2100 = vunpack.c.h.b16 %v1952
  %v2101 = vunpack.c.l.b16 %v1953
  %v2102 = vunpack.c.h.b16 %v1953
  %v2103 = vunpack.c.l.b16 %v1954
  %v2104 = vunpack.c.h.b16 %v1954
  %v2105 = vunpack.c.l.b16 %v1955
  %v2106 = vunpack.c.h.b16 %v1955
  %v2107 = vunpack.c.l.b16 %v1956
  %v2108 = vunpack.c.h.b16 %v1956
  %v2109 = vunpack.c.l.b16 %v1957
  %v2110 = vunpack.c.h.b16 %v1957
  %v2111 = vunpack.c.l.b16 %v1958
  %v2112 = vunpack.c.h.b16 %v1958
  %v2113 = vunpack.c.l.b16 %v1959
  %v2114 = vunpack.c.h.b16 %v1959
  %v2115 = vunpack.c.l.b16 %v1960
  %v2116 = vunpack.c.h.b16 %v1960
  %v2117 = vunpack.c.l.b16 %v1961
  %v2118 = vunpack.c.h.b16 %v1961
  %v2119 = vunpack.c.l.b16 %v1962
  %v2120 = vunpack.c.h.b16 %v1962
  %v2121 = vunpack.c.l.b16 %v1963
  %v2122 = vunpack.c.h.b16 %v1963
  %v2123 = vunpack.c.l.b16 %v1964
  %v2124 = vunpack.c.h.b16 %v1964
  %v2125 = vunpack.c.l.b16 %v1965
  %v2126 = vunpack.c.h.b16 %v1965
  %v2127 = vunpack.c.l.b16 %v1966
  %v2128 = vunpack.c.h.b16 %v1966
  %v2129 = vunpack.c.l.b16 %v1967
  %v2130 = vunpack.c.h.b16 %v1967
  %v2131 = vunpack.c.l.b16 %v1968
  %v2132 = vunpack.c.h.b16 %v1968
  %v2133 = vunpack.c.l.b16 %v1969
  %v2134 = vunpack.c.h.b16 %v1969
  %v2135 = vunpack.c.l.b16 %v1970
  %v2136 = vunpack.c.h.b16 %v1970
  %v2137 = vunpack.c.l.b16 %v1971
  %v2138 = vunpack.c.h.b16 %v1971
  %v2139 = vunpack.c.l.b16 %v1972
  %v2140 = vunpack.c.h.b16 %v1972
  %v2141 = vunpack.c.l.b16 %v1973
  %v2142 = vunpack.c.h.b16 %v1973
  %v2143 = vunpack.c.l.b16 %v1974
  %v2144 = vunpack.c.h.b16 %v1974
  %v2145 = vunpack.c.l.b16 %v1975
  %v2146 = vunpack.c.h.b16 %v1975
  %v2147 = vunpack.c.l.b16 %v1976
  %v2148 = vunpack.c.h.b16 %v1976
  %v2149 = vunpack.c.l.b16 %v1977
  %v2150 = vunpack.c.h.b16 %v1977
  %v2151 = vunpack.c.l.b16 %v1978
  %v2152 = vunpack.c.h.b16 %v1978
  %v2153 = vunpack.c.l.b16 %v1979
  %v2154 = vunpack.c.h.b16 %v1979
  %v2155 = vunpack.c.l.b16 %v1980
  %v2156 = vunpack.c.h.b16 %v1980
  %v2157 = vunpack.c.l.b16 %v1981
  %v2158 = vunpack.c.h.b16 %v1981
  %v2159 = vunpack.c.l.b16 %v1982
  %v2160 = vunpack.c.h.b16 %v1982
  %v2161 = vunpack.c.l.b16 %v1983
  %v2162 = vunpack.c.h.b16 %v1983
  %v2163 = vunpack.c.l.b16 %v1984
  %v2164 = vunpack.c.h.b16 %v1984
  %v2165 = vunpack.c.l.b16 %v1985
  %v2166 = vunpack.c.h.b16 %v1985
  %v2167 = vunpack.c.l.b16 %v1986
  %v2168 = vunpack.c.h.b16 %v1986
  %v2169 = vunpack.c.l.b16 %v1987
  %v2170 = vunpack.c.h.b16 %v1987
  %v2171 = vunpack.c.l.b16 %v1988
  %v2172 = vunpack.c.h.b16 %v1988
  %v2173 = vunpack.c.l.b16 %v1989
  %v2174 = vunpack.c.h.b16 %v1989
  %v2175 = vunpack.c.l.b16 %v1990
  %v2176 = vunpack.c.h.b16 %v1990
  %v2177 = vunpack.c.l.b16 %v1991
  %v2178 = vunpack.c.h.b16 %v1991
  %v2179 = vunpack.c.l.b16 %v1992
  %v2180 = vunpack.c.h.b16 %v1992
  %v2181 = vunpack.c.l.b16 %v1993
  %v2182 = vunpack.c.h.b16 %v1993
  %v2183 = vunpack.c.l.b16 %v1994
  %v2184 = vunpack.c.h.b16 %v1994
  %v2185 = vunpack.c.l.b16 %v1995
  %v2186 = vunpack.c.h.b16 %v1995
  %v2187 = vunpack.c.l.b16 %v1996
  %v2188 = vunpack.c.h.b16 %v1996
  %v2189 = vunpack.c.l.b16 %v1997
  %v2190 = vunpack.c.h.b16 %v1997
  %v2191 = vunpack.c.l.b16 %v1998
  %v2192 = vunpack.c.h.b16 %v1998
  %v2193 = vunpack.c.l.b16 %v1999
  %v2194 = vunpack.c.h.b16 %v1999
  %v2195 = vunpack.c.l.b16 %v2000
  %v2196 = vunpack.c.h.b16 %v2000
  %v2197 = vunpack.c.l.b16 %v2001
  %v2198 = vunpack.c.h.b16 %v2001
  %v2199 = vunpack.c.l.b16 %v2002
  %v2200 = vunpack.c.h.b16 %v2002
  %v2201 = vunpack.c.l.b16 %v2003
  %v2202 = vunpack.c.h.b16 %v2003
  %v2203 = vunpack.c.l.b16 %v2004
  %v2204 = vunpack.c.h.b16 %v2004
  %v2205 = vunpack.c.l.b16 %v2005
  %v2206 = vunpack.c.h.b16 %v2005
  %v2207 = vunpack.c.l.b16 %v2006
  %v2208 = vunpack.c.h.b16 %v2006
  %v2209 = vunpack.c.l.b16 %v2007
  %v2210 = vunpack.c.h.b16 %v2007
  %v2211 = vunpack.c.l.b16 %v2008
  %v2212 = vunpack.c.h.b16 %v2008
  %v2213 = vpack.c.b16 %v2087, %v2085
  %v2214 = vpack.c.b16 %v2088, %v2086
  %v2215 = vpack.c.b16 %v2091, %v2089
  %v2216 = vpack.c.b16 %v2092, %v2090
  %v2217 = vpack.c.b16 %v2095, %v2093
  %v2218 = vpack.c.b16 %v2096, %v2094
  %v2219 = vpack.c.b16 %v2099, %v2097
  %v2220 = vpack.c.b16 %v2100, %v2098
  %v2221 = vpack.c.b16 %v2103, %v2101
  %v2222 = vpack.c.b16 %v2104, %v2102
  %v2223 = vpack.c.b16 %v2107, %v2105
  %v2224 = vpack.c.b16 %v2108, %v2106
  %v2225 = vpack.c.b16 %v2111, %v2109
  %v2226 = vpack.c.b16 %v2112, %v2110
  %v2227 = vpack.c.b16 %v2115, %v2113
  %v2228 = vpack.c.b16 %v2116, %v2114
  %v2229 = vpack.c.b16 %v2119, %v2117
  %v2230 = vpack.c.b16 %v2120, %v2118
  %v2231 = vpack.c.b16 %v2123, %v2121
  %v2232 = vpack.c.b16 %v2124, %v2122
  %v2233 = vpack.c.b16 %v2127, %v2125
  %v2234 = vpack.c.b16 %v2128, %v2126
  %v2235 = vpack.c.b16 %v2131, %v2129
  %v2236 = vpack.c.b16 %v2132, %v2130
  %v2237 = vpack.c.b16 %v2135, %v2133
  %v2238 = vpack.c.b16 %v2136, %v2134
  %v2239 = vpack.c.b16 %v2139, %v2137
  %v2240 = vpack.c.b16 %v2140, %v2138
  %v2241 = vpack.c.b16 %v2143, %v2141
  %v2242 = vpack.c.b16 %v2144, %v2142
  %v2243 = vpack.c.b16 %v2147, %v2145
  %v2244 = vpack.c.b16 %v2148, %v2146
  %v2245 = vpack.c.b16 %v2151, %v2149
  %v2246 = vpack.c.b16 %v2152, %v2150
  %v2247 = vpack.c.b16 %v2155, %v2153
  %v2248 = vpack.c.b16 %v2156, %v2154
  %v2249 = vpack.c.b16 %v2159, %v2157
  %v2250 = vpack.c.b16 %v2160, %v2158
  %v2251 = vpack.c.b16 %v2163, %v2161
  %v2252 = vpack.c.b16 %v2164, %v2162
  %v2253 = vpack.c.b16 %v2167, %v2165
  %v2254 = vpack.c.b16 %v2168, %v2166
  %v2255 = vpack.c.b16 %v2171, %v2169
  %v2256 = vpack.c.b16 %v2172, %v2170
  %v2257 = vpack.c.b16 %v2175, %v2173
  %v2258 = vpack.c.b16 %v2176, %v2174
  %v2259 = vpack.c.b16 %v2179, %v2177
  %v2260 = vpack.c.b16 %v2180, %v2178
  %v2261 = vpack.c.b16 %v2183, %v2181
  %v2262 = vpack.c.b16 %v2184, %v2182
  %v2263 = vpack.c.b16 %v2187, %v2185
  %v2264 = vpack.c.b16 %v2188, %v2186
  %v2265 = vpack.c.b16 %v2191, %v2189
  %v2266 = vpack.c.b16 %v2192, %v2190
  %v2267 = vpack.c.b16 %v2195, %v2193
  %v2268 = vpack.c.b16 %v2196, %v2194
  %v2269 = vpack.c.b16 %v2199, %v2197
  %v2270 = vpack.c.b16 %v2200, %v2198
  %v2271 = vpack.c.b16 %v2203, %v2201
  %v2272 = vpack.c.b16 %v2204, %v2202
  %v2273 = vpack.c.b16 %v2207, %v2205
  %v2274 = vpack.c.b16 %v2208, %v2206
  %v2275 = vpack.c.b16 %v2211, %v2209
  %v2276 = vpack.c.b16 %v2212, %v2210
  %2341 = vmatprep.subr.bf16.mxu0 %v2228
  %2342 = vmatpush1.bf16.msra.mxu0 %v2227
  %2343 = vmatprep.subr.bf16.mxu0 %v2226
  %2344 = vmatpush1.bf16.msra.mxu0 %v2225
  %2345 = vmatprep.subr.bf16.mxu0 %v2224
  %2346 = vmatpush1.bf16.msra.mxu0 %v2223
  %2347 = vmatprep.subr.bf16.mxu0 %v2222
  %2348 = vmatpush1.bf16.msra.mxu0 %v2221
  %2349 = vmatprep.subr.bf16.mxu0 %v2220
  %2350 = vmatpush1.bf16.msra.mxu0 %v2219
  %2351 = vmatprep.subr.bf16.mxu0 %v2218
  %2352 = vmatpush1.bf16.msra.mxu0 %v2217
  %2353 = vmatprep.subr.bf16.mxu0 %v2216
  %2354 = vmatpush1.bf16.msra.mxu0 %v2215
  %2355 = vmatprep.subr.bf16.mxu0 %v2214
  %2356 = vmatpush1.bf16.msra.mxu0 %v2213
  %2357 = vmatprep.subr.bf16.mxu0 %v2244
  %2358 = vmatpush2.bf16.msra.mxu0 %v2243
  %2359 = vmatprep.subr.bf16.mxu0 %v2242
  %2360 = vmatpush2.bf16.msra.mxu0 %v2241
  %2361 = vmatprep.subr.bf16.mxu0 %v2240
  %2362 = vmatpush2.bf16.msra.mxu0 %v2239
  %2363 = vmatprep.subr.bf16.mxu0 %v2238
  %2364 = vmatpush2.bf16.msra.mxu0 %v2237
  %2365 = vmatprep.subr.bf16.mxu0 %v2236
  %2366 = vmatpush2.bf16.msra.mxu0 %v2235
  %2367 = vmatprep.subr.bf16.mxu0 %v2234
  %2368 = vmatpush2.bf16.msra.mxu0 %v2233
  %2369 = vmatprep.subr.bf16.mxu0 %v2232
  %2370 = vmatpush2.bf16.msra.mxu0 %v2231
  %2371 = vmatprep.subr.bf16.mxu0 %v2230
  %2372 = vmatpush2.bf16.msra.mxu0 %v2229
  %2373 = vmatprep.mubr.bf16.mxu0 %v1942
  %2374 = vmatmul.mubr.bf16.gmra.mxu0 %v1941
  %v2375 = vpop.f32.mrf.mxu0
  %v2376 = vadd.f32 %v2014, %v2375
  %v2377 = vpop.f32.mrf.mxu0
  %v2378 = vadd.f32 %v2018, %v2377
  %v2379 = vpop.f32.mrf.mxu0
  %v2380 = vpop.f32.mrf.mxu0
  %2381 = vdwg.mxu0
  %2382 = vmatprep.subr.bf16.mxu0 %v2260
  %2383 = vmatpush1.bf16.msra.mxu0 %v2259
  %2384 = vmatprep.subr.bf16.mxu0 %v2258
  %2385 = vmatpush1.bf16.msra.mxu0 %v2257
  %2386 = vmatprep.subr.bf16.mxu0 %v2256
  %2387 = vmatpush1.bf16.msra.mxu0 %v2255
  %2388 = vmatprep.subr.bf16.mxu0 %v2254
  %2389 = vmatpush1.bf16.msra.mxu0 %v2253
  %2390 = vmatprep.subr.bf16.mxu0 %v2252
  %2391 = vmatpush1.bf16.msra.mxu0 %v2251
  %2392 = vmatprep.subr.bf16.mxu0 %v2250
  %2393 = vmatpush1.bf16.msra.mxu0 %v2249
  %2394 = vmatprep.subr.bf16.mxu0 %v2248
  %2395 = vmatpush1.bf16.msra.mxu0 %v2247
  %2396 = vmatprep.subr.bf16.mxu0 %v2246
  %2397 = vmatpush1.bf16.msra.mxu0 %v2245
  %2398 = vmatprep.subr.bf16.mxu0 %v2276
  %2399 = vmatpush2.bf16.msra.mxu0 %v2275
  %2400 = vmatprep.subr.bf16.mxu0 %v2274
  %2401 = vmatpush2.bf16.msra.mxu0 %v2273
  %2402 = vmatprep.subr.bf16.mxu0 %v2272
  %2403 = vmatpush2.bf16.msra.mxu0 %v2271
  %2404 = vmatprep.subr.bf16.mxu0 %v2270
  %2405 = vmatpush2.bf16.msra.mxu0 %v2269
  %2406 = vmatprep.subr.bf16.mxu0 %v2268
  %2407 = vmatpush2.bf16.msra.mxu0 %v2267
  %2408 = vmatprep.subr.bf16.mxu0 %v2266
  %2409 = vmatpush2.bf16.msra.mxu0 %v2265
  %2410 = vmatprep.subr.bf16.mxu0 %v2264
  %2411 = vmatpush2.bf16.msra.mxu0 %v2263
  %2412 = vmatprep.subr.bf16.mxu0 %v2262
  %2413 = vmatpush2.bf16.msra.mxu0 %v2261
  %2414 = vmatprep.mubr.bf16.mxu0 %v1944
  %2415 = vmatmul.mubr.bf16.gmra.mxu0 %v1943
  %v2416 = vpop.f32.mrf.mxu0
  %v2417 = vadd.f32 %v2376, %v2416
  %v2418 = vpop.f32.mrf.mxu0
  %v2419 = vadd.f32 %v2378, %v2418
  %v2420 = vpop.f32.mrf.mxu0
  %v2421 = vpop.f32.mrf.mxu0
  %2422 = vdwg.mxu0
  %vm2423 = vcmp.gt.f32.partialorder %v2417, 0.0
  %vm2424 = vcmp.gt.f32.partialorder %v2419, 0.0
  %v2425 = vmul.f32 %v2417, 0.2
  %v2426 = vmul.f32 %v2419, 0.2
  %v2427 = vsel %vm2423, %v2417, %v2425
  %v2428 = vsel %vm2424, %v2419, %v2426
  %v2429 = vld [vmem:[%s5] sm:$0x3]
  %v2431 = vlaneseq
  %v2432 = vshrl.u32 %v2431, 7
  %v2433 = vsub.s32 0, %v2432
  %v2434 = vrot.slane %v2429, %v2433
  %v2435 = vlaneseq
  %v2436 = vshrl.u32 %v2435, 7
  %v2437 = vsub.s32 1, %v2436
  %v2438 = vrot.slane %v2429, %v2437
  %v2441 = vmul.f32 %v2427, %v2434
  %v2442 = vmul.f32 %v2428, %v2438
  %v2443 = vadd.f32 %v2441, %v2442
  %2444 = vadd.xlane.f32.xlu0 %v2443
  %v2445 = vpop.xlane.xlu0 %2444
  %s2446 = sld [smem:[#allocation2]]
  %v2447 = vstv %s2446
  %v2448 = vadd.f32 %v2445, %v2447
  %v2449 = vsub.f32 0.0, %v2448
  %v2450 = vmul.f32 %v2449, 1.442695
  %v2451 = vpow.pop %v2450
  %v2452 = vadd.f32 %v2451, 1.0
  %v2453 = vrcp.pop %v2452
  %v2454 = vmul.f32 1.0, %v2453
  %vm2455 = vcmask 7168
  %2456 = vst.msk [vmem:[%s7] sm:$0xff] %vm2455, %v2454
  // Predicated region
  $region30: #{discriminator_forward.1} parent=0 // pred_check
    _
  $region31: #{discriminator_forward.1} parent=0 // pred_check_branch
    %2458 = sbr.rel (0) target = $region33
  $region32: #{discriminator_forward.1} parent=0 // pred_region
    _
  $region33: #{discriminator_forward.1} parent=0 // pred_fallthru
    _
  // Predicated region
  $region34: #{discriminator_forward.1} parent=0 // pred_check
    _
  $region35: #{discriminator_forward.1} parent=0 // pred_check_branch
    %2460 = sbr.rel (0) target = $region37
  $region36: #{discriminator_forward.1} parent=0 // pred_region
    _
  $region37: #{discriminator_forward.1} parent=0 // pred_fallthru
    _

</llo_original>
